<compile_context>
chip_gen: v7x
topology: tpu7x:2x2x1
jax: 0.10.0
libtpu: 0.0.40
codegen_flags: <defaults>
</compile_context>

<pallas_src>
import functools

import jax
import jax.numpy as jnp
from jax import lax
from jax.experimental import pallas as pl
from jax.experimental.pallas import tpu as pltpu


def _round_up(x, m):
    return ((x + m - 1) // m) * m


# ----------------------------------------------------------------------------
# Pallas kernel: one batch tile = tile_bs samples x ne entities x na agents
# ----------------------------------------------------------------------------
def _entity_pool_kernel(ent_ref, keep_ref, w_in_ref, b_in_ref, w_out_ref, b_out_ref,
                        out_ref, *, n_agents, n_entities, in_dim, pooling_type,
                        compute_dtype):
    ne = n_entities
    na = n_agents
    embed = w_in_ref.shape[1]
    out_dim = w_out_ref.shape[1]

    w_in = w_in_ref[...]                      # (in_dim, embed)  compute_dtype
    w_out = w_out_ref[...]                    # (embed, out_dim) compute_dtype
    b_in = b_in_ref[...]                      # (1, embed)   f32
    b_out = b_out_ref[...]                    # (1, out_dim) f32

    # ---- in_trans: one small MXU matmul per entity (M = tile_bs, K = N = 32) ----
    # ent_ref is (tile, ne*in_dim); each entity slab is a static lane slice.
    et = []
    for n in range(ne):                       # ne is small -> static unroll
        xn = ent_ref[:, n * in_dim:(n + 1) * in_dim].astype(compute_dtype)
        et.append(jnp.dot(xn, w_in, preferred_element_type=jnp.float32) + b_in)

    # ---- masked pooling over entities + out_trans + post mask, per agent ----
    # keep_ref is (tile, na*ne + na) bf16: columns [a*ne + n] = 1 - pre_mask,
    # columns [na*ne + a] = 1 - post_mask.  One (tile, 1) slice per use -> VPU
    # lane-broadcast multiply; never hoist the whole mask into vregs.
    inv_ne = 1.0 / ne
    for a in range(na):
        pooled = None
        for n in range(ne):
            j = a * ne + n
            k = keep_ref[:, j:j + 1].astype(jnp.float32)          # (tile, 1)
            contrib = k * et[n]                                    # (tile, embed)
            if pooled is None:
                pooled = contrib
            elif pooling_type == "max":
                pooled = jnp.maximum(pooled, contrib)
            else:
                pooled = pooled + contrib
        if pooling_type == "mean":
            pooled = pooled * inv_ne

        y = jnp.dot(pooled.astype(compute_dtype), w_out,
                    preferred_element_type=jnp.float32) + b_out     # (tile, out_dim)
        kp = keep_ref[:, na * ne + a:na * ne + a + 1].astype(jnp.float32)
        y = y * kp                                                   # zero masked agents
        out_ref[:, a * out_dim:(a + 1) * out_dim] = y.astype(out_ref.dtype)


# ----------------------------------------------------------------------------
# pallas_call wrapper
# ----------------------------------------------------------------------------
@functools.partial(jax.jit, static_argnames=("pooling_type", "n_agents", "tile_bs",
                                             "compute_dtype"))
def entity_pooling_forward(params, entities, pre_mask, post_mask, *,
                           pooling_type, n_agents, tile_bs, compute_dtype):
    bs, ne, in_dim = entities.shape
    embed = params["w_in"].shape[1]
    out_dim = params["w_out"].shape[1]
    na = n_agents

    # torch: n_queries = post_mask.shape[1]; pre_mask = pre_mask[:, :n_queries]
    nq = na if post_mask is None else post_mask.shape[1]
    if nq != na:
        raise ValueError("post_mask must cover exactly n_agents queries")

    # ---- lane-dense combined keep mask (tiny arrays; wrapper ops are negligible) ----
    mask_dtype = jnp.bfloat16
    if pre_mask is None:
        keep_pre = jnp.ones((bs, na * ne), mask_dtype)
    else:
        keep_pre = jnp.logical_not(pre_mask[:, :na].astype(bool)).astype(mask_dtype)
        keep_pre = keep_pre.reshape(bs, na * ne)
    if post_mask is None:
        keep_post = jnp.ones((bs, na), mask_dtype)
    else:
        keep_post = jnp.logical_not(post_mask.astype(bool)).astype(mask_dtype)
    keep = jnp.concatenate([keep_pre, keep_post], axis=1)           # (bs, na*ne + na)

    # Flatten entities (reshape only, no transpose): a (tile, ne*in_dim) block pads
    # lanes 192->256 (1.33x) instead of a (tile, ne, in_dim) block padding (6,32)->(8,128).
    ents = entities.reshape(bs, ne * in_dim)

    # ---- batch tiling: big tiles amortise the ~0.35 us per-step pipeline tax, but cap
    #      so the grid keeps >= 2 steps whenever possible (feed both v7x TensorCores). ----
    tile = min(tile_bs, max(16, _round_up(pl.cdiv(bs, 2), 16)))
    grid_n = pl.cdiv(bs, tile)
    bs_p = grid_n * tile
    pad = bs_p - bs
    if pad:                                   # only the ragged tail pays for a pad copy
        ents = jnp.pad(ents, ((0, pad), (0, 0)))
        keep = jnp.pad(keep, ((0, pad), (0, 0)))

    w_in = params["w_in"].astype(compute_dtype)
    w_out = params["w_out"].astype(compute_dtype)
    b_in = params["b_in"].astype(jnp.float32)
    b_out = params["b_out"].astype(jnp.float32)

    kernel = functools.partial(_entity_pool_kernel, n_agents=na, n_entities=ne,
                               in_dim=in_dim, pooling_type=pooling_type,
                               compute_dtype=compute_dtype)

    out_flat = pl.pallas_call(
        kernel,
        out_shape=jax.ShapeDtypeStruct((bs_p, na * out_dim), jnp.float32),
        grid_spec=pltpu.PrefetchScalarGridSpec(
            num_scalar_prefetch=0,
            grid=(grid_n,),
            in_specs=[
                pl.BlockSpec((tile, ne * in_dim), lambda i: (i, 0)),     # entities
                pl.BlockSpec((tile, na * ne + na), lambda i: (i, 0)),    # keep masks
                pl.BlockSpec((in_dim, embed), lambda i: (0, 0)),         # w_in
                pl.BlockSpec((1, embed), lambda i: (0, 0)),              # b_in
                pl.BlockSpec((embed, out_dim), lambda i: (0, 0)),        # w_out
                pl.BlockSpec((1, out_dim), lambda i: (0, 0)),            # b_out
            ],
            out_specs=pl.BlockSpec((tile, na * out_dim), lambda i: (i, 0)),
        ),
        compiler_params=pltpu.CompilerParams(
            dimension_semantics=("parallel",),
            # Explicit VMEM budget (review): ~1 MB/step double-buffered blocks + a few MB
            # of temporaries at tile_bs=512 -> 32 MiB is ample on v5e/v6e/v7x alike.
            vmem_limit_bytes=32 * 1024 * 1024,
        ),
    )(ents, keep, w_in, b_in, w_out, b_out)

    return out_flat[:bs].reshape(bs, na, out_dim)                    # (bs, na, out_dim)


# ----------------------------------------------------------------------------
# module wrapper (mirrors EntityPoolingLayer)
# ----------------------------------------------------------------------------
class EntityPoolingLayerPallas:
    def __init__(self, in_dim, embed_dim, out_dim, pooling_type, args, key,
                 compute_dtype=jnp.bfloat16, tile_bs=512):
        assert pooling_type in ("max", "mean")
        assert tile_bs % 16 == 0 and tile_bs >= 16
        self.in_dim = in_dim
        self.embed_dim = embed_dim
        self.out_dim = out_dim
        self.pooling_type = pooling_type
        self.n_agents = args.n_agents
        self.compute_dtype = compute_dtype
        self.tile_bs = tile_bs

        def uinit(k, shape, fan_in):
            bound = 1.0 / (fan_in ** 0.5)
            return jax.random.uniform(k, shape, jnp.float32, -bound, bound)

        ks = jax.random.split(key, 4)
        # weights stored pre-transposed as (in_features, out_features)
        self.params = {
            "w_in": uinit(ks[0], (in_dim, embed_dim), in_dim),
            "b_in": uinit(ks[1], (1, embed_dim), in_dim),
            "w_out": uinit(ks[2], (embed_dim, out_dim), embed_dim),
            "b_out": uinit(ks[3], (1, out_dim), embed_dim),
        }

    def forward(self, entities, pre_mask=None, post_mask=None, ret_attn_logits=None):
        out = entity_pooling_forward(
            self.params, entities, pre_mask, post_mask,
            pooling_type=self.pooling_type, n_agents=self.n_agents,
            tile_bs=self.tile_bs, compute_dtype=self.compute_dtype)
        if ret_attn_logits is not None:
            return out, None
        return out


# ----------------------------------------------------------------------------
# pure-JAX reference (matches the PyTorch module)
# ----------------------------------------------------------------------------
def _entity_pooling_reference(params, entities, pre_mask, post_mask,
                              pooling_type, n_agents):
    bs, ne, _ = entities.shape
    ents_trans = jnp.einsum("bnd,de->bne", entities, params["w_in"],
                            precision=lax.Precision.HIGHEST) + params["b_in"]
    rep = jnp.broadcast_to(ents_trans[:, None],
                           (bs, n_agents, ne, ents_trans.shape[-1]))
    nq = post_mask.shape[1]
    if pre_mask is not None:
        pm = pre_mask[:, :nq].astype(bool)
        rep = jnp.where(pm[..., None], 0.0, rep)
    if pooling_type == "max":
        pooled = rep.max(axis=2)
    else:
        pooled = rep.mean(axis=2)
    out = jnp.einsum("bae,eo->bao", pooled, params["w_out"],
                     precision=lax.Precision.HIGHEST) + params["b_out"]
    out = jnp.where(post_mask.astype(bool)[..., None], 0.0, out)
    return out


# ----------------------------------------------------------------------------
# demo
# ----------------------------------------------------------------------------
if __name__ == "__main__":
    class Args:
        n_agents = 3

    args = Args()
    bs, ne = 40, 6                           # tile=32 -> grid=2, exercises the pad path
    in_dim = embed_dim = out_dim = 32        # REFIL: in_dim == embed_dim == out_dim

    key = jax.random.PRNGKey(0)
    kp, ke, kpre, kpost = jax.random.split(key, 4)

    layer_max = EntityPoolingLayerPallas(in_dim, embed_dim, out_dim, "max", args, kp)
    layer_mean = EntityPoolingLayerPallas(in_dim, embed_dim, out_dim, "mean", args, kp)
    layer_f32 = EntityPoolingLayerPallas(in_dim, embed_dim, out_dim, "max", args, kp,
                                         compute_dtype=jnp.float32)
    layer_mean.params = layer_max.params
    layer_f32.params = layer_max.params

    entities = jax.random.normal(ke, (bs, ne, in_dim), jnp.float32)
    pre_mask = jax.random.bernoulli(kpre, 0.3, (bs, ne, ne))        # True = mask out
    post_mask = jax.random.bernoulli(kpost, 0.2, (bs, args.n_agents))

    out_max = layer_max.forward(entities, pre_mask, post_mask)      # bf16 operands
    out_mean = layer_mean.forward(entities, pre_mask, post_mask)
    out_f32 = layer_f32.forward(entities, pre_mask, post_mask)      # f32 operands
    jax.block_until_ready((out_max, out_mean, out_f32))

    assert out_max.shape == (bs, args.n_agents, out_dim)
    assert out_mean.shape == (bs, args.n_agents, out_dim)

    ref_max = _entity_pooling_reference(layer_max.params, entities, pre_mask,
                                        post_mask, "max", args.n_agents)
    ref_mean = _entity_pooling_reference(layer_max.params, entities, pre_mask,
                                         post_mask, "mean", args.n_agents)
    assert bool(jnp.allclose(out_max, ref_max, atol=1e-1, rtol=1e-1))    # bf16 MXU path
    assert bool(jnp.allclose(out_mean, ref_mean, atol=1e-1, rtol=1e-1))
    assert bool(jnp.allclose(out_f32, ref_max, atol=2e-2, rtol=2e-2))    # f32 path
    # post-masked agents must be exactly zero
    assert bool(jnp.all(jnp.where(post_mask[..., None], out_max == 0.0, True)))

    # --- pre_mask=None path ---
    out_nopre = layer_f32.forward(entities, None, post_mask)
    ref_nopre = _entity_pooling_reference(layer_max.params, entities, None,
                                          post_mask, "max", args.n_agents)
    assert bool(jnp.allclose(out_nopre, ref_nopre, atol=2e-2, rtol=2e-2))

    # --- post_mask=None path (torch would crash; we treat it as "no post masking") ---
    out_nopost = layer_f32.forward(entities, pre_mask, None)
    ref_nopost = _entity_pooling_reference(layer_max.params, entities, pre_mask,
                                           jnp.zeros((bs, args.n_agents), bool),
                                           "max", args.n_agents)
    jax.block_until_ready((out_nopre, out_nopost))
    assert bool(jnp.allclose(out_nopost, ref_nopost, atol=2e-2, rtol=2e-2))

    # --- ret_attn_logits path returns (out, None) like the torch module ---
    out_tup = layer_max.forward(entities, pre_mask, post_mask, ret_attn_logits=True)
    assert out_tup[1] is None
    jax.block_until_ready(out_tup[0])

    print("KERNEL_OK")
</pallas_src>

<mosaic_0001>
module attributes {stable_mosaic.version = 11 : i64} {
  func.func @_entity_pool_kernel(%arg0: i32, %arg1: memref<32x192xf32, #tpu.memory_space<vmem>>, %arg2: memref<32x21xbf16, #tpu.memory_space<vmem>>, %arg3: memref<32x32xbf16, #tpu.memory_space<vmem>>, %arg4: memref<1x32xf32, #tpu.memory_space<vmem>>, %arg5: memref<32x32xbf16, #tpu.memory_space<vmem>>, %arg6: memref<1x32xf32, #tpu.memory_space<vmem>>, %arg7: memref<32x96xf32, #tpu.memory_space<vmem>>) attributes {dimension_semantics = [#tpu.dimension_semantics<parallel>], iteration_bounds = array<i64: 2>, scalar_prefetch = 0 : i64, scratch_operands = 0 : i64, tpu.core_type = #tpu.core_type<tc>, window_params = [{transform_indices = @transform_0, window_bounds = array<i64: 32, 192>}, {transform_indices = @transform_1, window_bounds = array<i64: 32, 21>}, {pipeline_mode = #tpu.pipeline_mode<synchronous>, transform_indices = @transform_2, window_bounds = array<i64: 32, 32>}, {pipeline_mode = #tpu.pipeline_mode<synchronous>, transform_indices = @transform_3, window_bounds = array<i64: 1, 32>}, {pipeline_mode = #tpu.pipeline_mode<synchronous>, transform_indices = @transform_4, window_bounds = array<i64: 32, 32>}, {pipeline_mode = #tpu.pipeline_mode<synchronous>, transform_indices = @transform_5, window_bounds = array<i64: 1, 32>}, {transform_indices = @transform_6, window_bounds = array<i64: 32, 96>}]} {
    %c0 = arith.constant 0 : index
    %c0_0 = arith.constant 0 : index
    %0 = vector.load %arg3[%c0, %c0_0] : memref<32x32xbf16, #tpu.memory_space<vmem>>, vector<32x32xbf16>
    %c0_1 = arith.constant 0 : index
    %c0_2 = arith.constant 0 : index
    %1 = vector.load %arg5[%c0_1, %c0_2] : memref<32x32xbf16, #tpu.memory_space<vmem>>, vector<32x32xbf16>
    %c0_3 = arith.constant 0 : index
    %c0_4 = arith.constant 0 : index
    %2 = vector.load %arg4[%c0_3, %c0_4] : memref<1x32xf32, #tpu.memory_space<vmem>>, vector<1x32xf32>
    %c0_5 = arith.constant 0 : index
    %c0_6 = arith.constant 0 : index
    %3 = vector.load %arg6[%c0_5, %c0_6] : memref<1x32xf32, #tpu.memory_space<vmem>>, vector<1x32xf32>
    %c0_7 = arith.constant 0 : index
    %c0_8 = arith.constant 0 : index
    %4 = vector.load %arg1[%c0_7, %c0_8] : memref<32x192xf32, #tpu.memory_space<vmem>>, vector<32x32xf32>
    %5 = arith.truncf %4 : vector<32x32xf32> to vector<32x32xbf16>
    %cst = arith.constant dense<0.000000e+00> : vector<32x32xf32>
    %6 = tpu.matmul %5, %0, %cst {dimension_numbers = #tpu.dot_dimension_numbers<[1], [0], [0], [1], [0, 0, 1, 1], [], []>} : vector<32x32xbf16>, vector<32x32xbf16>, vector<32x32xf32> -> vector<32x32xf32>
    %7 = vector.broadcast %2 : vector<1x32xf32> to vector<32x32xf32>
    %8 = arith.addf %6, %7 : vector<32x32xf32>
    %c0_9 = arith.constant 0 : index
    %c32 = arith.constant 32 : index
    %9 = vector.load %arg1[%c0_9, %c32] : memref<32x192xf32, #tpu.memory_space<vmem>>, vector<32x32xf32>
    %10 = arith.truncf %9 : vector<32x32xf32> to vector<32x32xbf16>
    %cst_10 = arith.constant dense<0.000000e+00> : vector<32x32xf32>
    %11 = tpu.matmul %10, %0, %cst_10 {dimension_numbers = #tpu.dot_dimension_numbers<[1], [0], [0], [1], [0, 0, 1, 1], [], []>} : vector<32x32xbf16>, vector<32x32xbf16>, vector<32x32xf32> -> vector<32x32xf32>
    %12 = vector.broadcast %2 : vector<1x32xf32> to vector<32x32xf32>
    %13 = arith.addf %11, %12 : vector<32x32xf32>
    %c0_11 = arith.constant 0 : index
    %c64 = arith.constant 64 : index
    %14 = vector.load %arg1[%c0_11, %c64] : memref<32x192xf32, #tpu.memory_space<vmem>>, vector<32x32xf32>
    %15 = arith.truncf %14 : vector<32x32xf32> to vector<32x32xbf16>
    %cst_12 = arith.constant dense<0.000000e+00> : vector<32x32xf32>
    %16 = tpu.matmul %15, %0, %cst_12 {dimension_numbers = #tpu.dot_dimension_numbers<[1], [0], [0], [1], [0, 0, 1, 1], [], []>} : vector<32x32xbf16>, vector<32x32xbf16>, vector<32x32xf32> -> vector<32x32xf32>
    %17 = vector.broadcast %2 : vector<1x32xf32> to vector<32x32xf32>
    %18 = arith.addf %16, %17 : vector<32x32xf32>
    %c0_13 = arith.constant 0 : index
    %c96 = arith.constant 96 : index
    %19 = vector.load %arg1[%c0_13, %c96] : memref<32x192xf32, #tpu.memory_space<vmem>>, vector<32x32xf32>
    %20 = arith.truncf %19 : vector<32x32xf32> to vector<32x32xbf16>
    %cst_14 = arith.constant dense<0.000000e+00> : vector<32x32xf32>
    %21 = tpu.matmul %20, %0, %cst_14 {dimension_numbers = #tpu.dot_dimension_numbers<[1], [0], [0], [1], [0, 0, 1, 1], [], []>} : vector<32x32xbf16>, vector<32x32xbf16>, vector<32x32xf32> -> vector<32x32xf32>
    %22 = vector.broadcast %2 : vector<1x32xf32> to vector<32x32xf32>
    %23 = arith.addf %21, %22 : vector<32x32xf32>
    %c0_15 = arith.constant 0 : index
    %c128 = arith.constant 128 : index
    %24 = vector.load %arg1[%c0_15, %c128] : memref<32x192xf32, #tpu.memory_space<vmem>>, vector<32x32xf32>
    %25 = arith.truncf %24 : vector<32x32xf32> to vector<32x32xbf16>
    %cst_16 = arith.constant dense<0.000000e+00> : vector<32x32xf32>
    %26 = tpu.matmul %25, %0, %cst_16 {dimension_numbers = #tpu.dot_dimension_numbers<[1], [0], [0], [1], [0, 0, 1, 1], [], []>} : vector<32x32xbf16>, vector<32x32xbf16>, vector<32x32xf32> -> vector<32x32xf32>
    %27 = vector.broadcast %2 : vector<1x32xf32> to vector<32x32xf32>
    %28 = arith.addf %26, %27 : vector<32x32xf32>
    %c0_17 = arith.constant 0 : index
    %c160 = arith.constant 160 : index
    %29 = vector.load %arg1[%c0_17, %c160] : memref<32x192xf32, #tpu.memory_space<vmem>>, vector<32x32xf32>
    %30 = arith.truncf %29 : vector<32x32xf32> to vector<32x32xbf16>
    %cst_18 = arith.constant dense<0.000000e+00> : vector<32x32xf32>
    %31 = tpu.matmul %30, %0, %cst_18 {dimension_numbers = #tpu.dot_dimension_numbers<[1], [0], [0], [1], [0, 0, 1, 1], [], []>} : vector<32x32xbf16>, vector<32x32xbf16>, vector<32x32xf32> -> vector<32x32xf32>
    %32 = vector.broadcast %2 : vector<1x32xf32> to vector<32x32xf32>
    %33 = arith.addf %31, %32 : vector<32x32xf32>
    %c0_19 = arith.constant 0 : index
    %c0_20 = arith.constant 0 : index
    %34 = vector.load %arg2[%c0_19, %c0_20] : memref<32x21xbf16, #tpu.memory_space<vmem>>, vector<32x1xbf16>
    %35 = arith.extf %34 : vector<32x1xbf16> to vector<32x1xf32>
    %36 = vector.broadcast %35 : vector<32x1xf32> to vector<32x32xf32>
    %37 = arith.mulf %36, %8 : vector<32x32xf32>
    %c0_21 = arith.constant 0 : index
    %c1 = arith.constant 1 : index
    %38 = vector.load %arg2[%c0_21, %c1] : memref<32x21xbf16, #tpu.memory_space<vmem>>, vector<32x1xbf16>
    %39 = arith.extf %38 : vector<32x1xbf16> to vector<32x1xf32>
    %40 = vector.broadcast %39 : vector<32x1xf32> to vector<32x32xf32>
    %41 = arith.mulf %40, %13 : vector<32x32xf32>
    %42 = arith.maximumf %37, %41 : vector<32x32xf32>
    %c0_22 = arith.constant 0 : index
    %c2 = arith.constant 2 : index
    %43 = vector.load %arg2[%c0_22, %c2] : memref<32x21xbf16, #tpu.memory_space<vmem>>, vector<32x1xbf16>
    %44 = arith.extf %43 : vector<32x1xbf16> to vector<32x1xf32>
    %45 = vector.broadcast %44 : vector<32x1xf32> to vector<32x32xf32>
    %46 = arith.mulf %45, %18 : vector<32x32xf32>
    %47 = arith.maximumf %42, %46 : vector<32x32xf32>
    %c0_23 = arith.constant 0 : index
    %c3 = arith.constant 3 : index
    %48 = vector.load %arg2[%c0_23, %c3] : memref<32x21xbf16, #tpu.memory_space<vmem>>, vector<32x1xbf16>
    %49 = arith.extf %48 : vector<32x1xbf16> to vector<32x1xf32>
    %50 = vector.broadcast %49 : vector<32x1xf32> to vector<32x32xf32>
    %51 = arith.mulf %50, %23 : vector<32x32xf32>
    %52 = arith.maximumf %47, %51 : vector<32x32xf32>
    %c0_24 = arith.constant 0 : index
    %c4 = arith.constant 4 : index
    %53 = vector.load %arg2[%c0_24, %c4] : memref<32x21xbf16, #tpu.memory_space<vmem>>, vector<32x1xbf16>
    %54 = arith.extf %53 : vector<32x1xbf16> to vector<32x1xf32>
    %55 = vector.broadcast %54 : vector<32x1xf32> to vector<32x32xf32>
    %56 = arith.mulf %55, %28 : vector<32x32xf32>
    %57 = arith.maximumf %52, %56 : vector<32x32xf32>
    %c0_25 = arith.constant 0 : index
    %c5 = arith.constant 5 : index
    %58 = vector.load %arg2[%c0_25, %c5] : memref<32x21xbf16, #tpu.memory_space<vmem>>, vector<32x1xbf16>
    %59 = arith.extf %58 : vector<32x1xbf16> to vector<32x1xf32>
    %60 = vector.broadcast %59 : vector<32x1xf32> to vector<32x32xf32>
    %61 = arith.mulf %60, %33 : vector<32x32xf32>
    %62 = arith.maximumf %57, %61 : vector<32x32xf32>
    %63 = arith.truncf %62 : vector<32x32xf32> to vector<32x32xbf16>
    %cst_26 = arith.constant dense<0.000000e+00> : vector<32x32xf32>
    %64 = tpu.matmul %63, %1, %cst_26 {dimension_numbers = #tpu.dot_dimension_numbers<[1], [0], [0], [1], [0, 0, 1, 1], [], []>} : vector<32x32xbf16>, vector<32x32xbf16>, vector<32x32xf32> -> vector<32x32xf32>
    %65 = vector.broadcast %3 : vector<1x32xf32> to vector<32x32xf32>
    %66 = arith.addf %64, %65 : vector<32x32xf32>
    %c0_27 = arith.constant 0 : index
    %c18 = arith.constant 18 : index
    %67 = vector.load %arg2[%c0_27, %c18] : memref<32x21xbf16, #tpu.memory_space<vmem>>, vector<32x1xbf16>
    %68 = arith.extf %67 : vector<32x1xbf16> to vector<32x1xf32>
    %69 = vector.broadcast %68 : vector<32x1xf32> to vector<32x32xf32>
    %70 = arith.mulf %66, %69 : vector<32x32xf32>
    %c0_28 = arith.constant 0 : index
    %c0_29 = arith.constant 0 : index
    %71 = vector.load %arg7[%c0_28, %c0_29] : memref<32x96xf32, #tpu.memory_space<vmem>>, vector<32x32xf32>
    tpu.vector_store %arg7[%c0_28, %c0_29], %70 {strides = array<i32>} : memref<32x96xf32, #tpu.memory_space<vmem>>, vector<32x32xf32>,
    %c0_30 = arith.constant 0 : index
    %c6 = arith.constant 6 : index
    %72 = vector.load %arg2[%c0_30, %c6] : memref<32x21xbf16, #tpu.memory_space<vmem>>, vector<32x1xbf16>
    %73 = arith.extf %72 : vector<32x1xbf16> to vector<32x1xf32>
    %74 = vector.broadcast %73 : vector<32x1xf32> to vector<32x32xf32>
    %75 = arith.mulf %74, %8 : vector<32x32xf32>
    %c0_31 = arith.constant 0 : index
    %c7 = arith.constant 7 : index
    %76 = vector.load %arg2[%c0_31, %c7] : memref<32x21xbf16, #tpu.memory_space<vmem>>, vector<32x1xbf16>
    %77 = arith.extf %76 : vector<32x1xbf16> to vector<32x1xf32>
    %78 = vector.broadcast %77 : vector<32x1xf32> to vector<32x32xf32>
    %79 = arith.mulf %78, %13 : vector<32x32xf32>
    %80 = arith.maximumf %75, %79 : vector<32x32xf32>
    %c0_32 = arith.constant 0 : index
    %c8 = arith.constant 8 : index
    %81 = vector.load %arg2[%c0_32, %c8] : memref<32x21xbf16, #tpu.memory_space<vmem>>, vector<32x1xbf16>
    %82 = arith.extf %81 : vector<32x1xbf16> to vector<32x1xf32>
    %83 = vector.broadcast %82 : vector<32x1xf32> to vector<32x32xf32>
    %84 = arith.mulf %83, %18 : vector<32x32xf32>
    %85 = arith.maximumf %80, %84 : vector<32x32xf32>
    %c0_33 = arith.constant 0 : index
    %c9 = arith.constant 9 : index
    %86 = vector.load %arg2[%c0_33, %c9] : memref<32x21xbf16, #tpu.memory_space<vmem>>, vector<32x1xbf16>
    %87 = arith.extf %86 : vector<32x1xbf16> to vector<32x1xf32>
    %88 = vector.broadcast %87 : vector<32x1xf32> to vector<32x32xf32>
    %89 = arith.mulf %88, %23 : vector<32x32xf32>
    %90 = arith.maximumf %85, %89 : vector<32x32xf32>
    %c0_34 = arith.constant 0 : index
    %c10 = arith.constant 10 : index
    %91 = vector.load %arg2[%c0_34, %c10] : memref<32x21xbf16, #tpu.memory_space<vmem>>, vector<32x1xbf16>
    %92 = arith.extf %91 : vector<32x1xbf16> to vector<32x1xf32>
    %93 = vector.broadcast %92 : vector<32x1xf32> to vector<32x32xf32>
    %94 = arith.mulf %93, %28 : vector<32x32xf32>
    %95 = arith.maximumf %90, %94 : vector<32x32xf32>
    %c0_35 = arith.constant 0 : index
    %c11 = arith.constant 11 : index
    %96 = vector.load %arg2[%c0_35, %c11] : memref<32x21xbf16, #tpu.memory_space<vmem>>, vector<32x1xbf16>
    %97 = arith.extf %96 : vector<32x1xbf16> to vector<32x1xf32>
    %98 = vector.broadcast %97 : vector<32x1xf32> to vector<32x32xf32>
    %99 = arith.mulf %98, %33 : vector<32x32xf32>
    %100 = arith.maximumf %95, %99 : vector<32x32xf32>
    %101 = arith.truncf %100 : vector<32x32xf32> to vector<32x32xbf16>
    %cst_36 = arith.constant dense<0.000000e+00> : vector<32x32xf32>
    %102 = tpu.matmul %101, %1, %cst_36 {dimension_numbers = #tpu.dot_dimension_numbers<[1], [0], [0], [1], [0, 0, 1, 1], [], []>} : vector<32x32xbf16>, vector<32x32xbf16>, vector<32x32xf32> -> vector<32x32xf32>
    %103 = vector.broadcast %3 : vector<1x32xf32> to vector<32x32xf32>
    %104 = arith.addf %102, %103 : vector<32x32xf32>
    %c0_37 = arith.constant 0 : index
    %c19 = arith.constant 19 : index
    %105 = vector.load %arg2[%c0_37, %c19] : memref<32x21xbf16, #tpu.memory_space<vmem>>, vector<32x1xbf16>
    %106 = arith.extf %105 : vector<32x1xbf16> to vector<32x1xf32>
    %107 = vector.broadcast %106 : vector<32x1xf32> to vector<32x32xf32>
    %108 = arith.mulf %104, %107 : vector<32x32xf32>
    %c0_38 = arith.constant 0 : index
    %c32_39 = arith.constant 32 : index
    %109 = vector.load %arg7[%c0_38, %c32_39] : memref<32x96xf32, #tpu.memory_space<vmem>>, vector<32x32xf32>
    tpu.vector_store %arg7[%c0_38, %c32_39], %108 {strides = array<i32>} : memref<32x96xf32, #tpu.memory_space<vmem>>, vector<32x32xf32>,
    %c0_40 = arith.constant 0 : index
    %c12 = arith.constant 12 : index
    %110 = vector.load %arg2[%c0_40, %c12] : memref<32x21xbf16, #tpu.memory_space<vmem>>, vector<32x1xbf16>
    %111 = arith.extf %110 : vector<32x1xbf16> to vector<32x1xf32>
    %112 = vector.broadcast %111 : vector<32x1xf32> to vector<32x32xf32>
    %113 = arith.mulf %112, %8 : vector<32x32xf32>
    %c0_41 = arith.constant 0 : index
    %c13 = arith.constant 13 : index
    %114 = vector.load %arg2[%c0_41, %c13] : memref<32x21xbf16, #tpu.memory_space<vmem>>, vector<32x1xbf16>
    %115 = arith.extf %114 : vector<32x1xbf16> to vector<32x1xf32>
    %116 = vector.broadcast %115 : vector<32x1xf32> to vector<32x32xf32>
    %117 = arith.mulf %116, %13 : vector<32x32xf32>
    %118 = arith.maximumf %113, %117 : vector<32x32xf32>
    %c0_42 = arith.constant 0 : index
    %c14 = arith.constant 14 : index
    %119 = vector.load %arg2[%c0_42, %c14] : memref<32x21xbf16, #tpu.memory_space<vmem>>, vector<32x1xbf16>
    %120 = arith.extf %119 : vector<32x1xbf16> to vector<32x1xf32>
    %121 = vector.broadcast %120 : vector<32x1xf32> to vector<32x32xf32>
    %122 = arith.mulf %121, %18 : vector<32x32xf32>
    %123 = arith.maximumf %118, %122 : vector<32x32xf32>
    %c0_43 = arith.constant 0 : index
    %c15 = arith.constant 15 : index
    %124 = vector.load %arg2[%c0_43, %c15] : memref<32x21xbf16, #tpu.memory_space<vmem>>, vector<32x1xbf16>
    %125 = arith.extf %124 : vector<32x1xbf16> to vector<32x1xf32>
    %126 = vector.broadcast %125 : vector<32x1xf32> to vector<32x32xf32>
    %127 = arith.mulf %126, %23 : vector<32x32xf32>
    %128 = arith.maximumf %123, %127 : vector<32x32xf32>
    %c0_44 = arith.constant 0 : index
    %c16 = arith.constant 16 : index
    %129 = vector.load %arg2[%c0_44, %c16] : memref<32x21xbf16, #tpu.memory_space<vmem>>, vector<32x1xbf16>
    %130 = arith.extf %129 : vector<32x1xbf16> to vector<32x1xf32>
    %131 = vector.broadcast %130 : vector<32x1xf32> to vector<32x32xf32>
    %132 = arith.mulf %131, %28 : vector<32x32xf32>
    %133 = arith.maximumf %128, %132 : vector<32x32xf32>
    %c0_45 = arith.constant 0 : index
    %c17 = arith.constant 17 : index
    %134 = vector.load %arg2[%c0_45, %c17] : memref<32x21xbf16, #tpu.memory_space<vmem>>, vector<32x1xbf16>
    %135 = arith.extf %134 : vector<32x1xbf16> to vector<32x1xf32>
    %136 = vector.broadcast %135 : vector<32x1xf32> to vector<32x32xf32>
    %137 = arith.mulf %136, %33 : vector<32x32xf32>
    %138 = arith.maximumf %133, %137 : vector<32x32xf32>
    %139 = arith.truncf %138 : vector<32x32xf32> to vector<32x32xbf16>
    %cst_46 = arith.constant dense<0.000000e+00> : vector<32x32xf32>
    %140 = tpu.matmul %139, %1, %cst_46 {dimension_numbers = #tpu.dot_dimension_numbers<[1], [0], [0], [1], [0, 0, 1, 1], [], []>} : vector<32x32xbf16>, vector<32x32xbf16>, vector<32x32xf32> -> vector<32x32xf32>
    %141 = vector.broadcast %3 : vector<1x32xf32> to vector<32x32xf32>
    %142 = arith.addf %140, %141 : vector<32x32xf32>
    %c0_47 = arith.constant 0 : index
    %c20 = arith.constant 20 : index
    %143 = vector.load %arg2[%c0_47, %c20] : memref<32x21xbf16, #tpu.memory_space<vmem>>, vector<32x1xbf16>
    %144 = arith.extf %143 : vector<32x1xbf16> to vector<32x1xf32>
    %145 = vector.broadcast %144 : vector<32x1xf32> to vector<32x32xf32>
    %146 = arith.mulf %142, %145 : vector<32x32xf32>
    %c0_48 = arith.constant 0 : index
    %c64_49 = arith.constant 64 : index
    %147 = vector.load %arg7[%c0_48, %c64_49] : memref<32x96xf32, #tpu.memory_space<vmem>>, vector<32x32xf32>
    tpu.vector_store %arg7[%c0_48, %c64_49], %146 {strides = array<i32>} : memref<32x96xf32, #tpu.memory_space<vmem>>, vector<32x32xf32>,
    return
  }
  func.func @transform_0(%arg0: i32) -> (i32, i32) {
    %c0_i32 = arith.constant 0 : i32
    %c0_i32_0 = arith.constant 0 : i32
    return %arg0, %c0_i32 : i32, i32
  }
  func.func @transform_1(%arg0: i32) -> (i32, i32) {
    %c0_i32 = arith.constant 0 : i32
    %c0_i32_0 = arith.constant 0 : i32
    return %arg0, %c0_i32 : i32, i32
  }
  func.func @transform_2(%arg0: i32) -> (i32, i32) {
    %c0_i32 = arith.constant 0 : i32
    %c0_i32_0 = arith.constant 0 : i32
    %c0_i32_1 = arith.constant 0 : i32
    return %c0_i32, %c0_i32_0 : i32, i32
  }
  func.func @transform_3(%arg0: i32) -> (i32, i32) {
    %c0_i32 = arith.constant 0 : i32
    %c0_i32_0 = arith.constant 0 : i32
    %c0_i32_1 = arith.constant 0 : i32
    return %c0_i32, %c0_i32_0 : i32, i32
  }
  func.func @transform_4(%arg0: i32) -> (i32, i32) {
    %c0_i32 = arith.constant 0 : i32
    %c0_i32_0 = arith.constant 0 : i32
    %c0_i32_1 = arith.constant 0 : i32
    return %c0_i32, %c0_i32_0 : i32, i32
  }
  func.func @transform_5(%arg0: i32) -> (i32, i32) {
    %c0_i32 = arith.constant 0 : i32
    %c0_i32_0 = arith.constant 0 : i32
    %c0_i32_1 = arith.constant 0 : i32
    return %c0_i32, %c0_i32_0 : i32, i32
  }
  func.func @transform_6(%arg0: i32) -> (i32, i32) {
    %c0_i32 = arith.constant 0 : i32
    %c0_i32_0 = arith.constant 0 : i32
    return %arg0, %c0_i32 : i32, i32
  }
}

</mosaic_0001>

<llo_original>
// kernel: entity_pooling_forward.1
$region0: #{entity_pooling_forward.1}
  #allocation0 [shape = 'u32[]', space=smem, size = 0x4, offset = 0x4, fixed_abs, tag = 'smem constant byte address 0x4 - core index']
  #allocation1 [shape = 'u32[144,128]{1,0:T(1,128)}', space=vmem, size = 0x12000, scoped, tag = 'internal scratch']
  %s0 = inlined_call_operand.vmem [shape: f32[64,192], index: 0, kind: input, shape index: {}]
  %s1 = inlined_call_operand.vmem [shape: bf16[64,21], index: 1, kind: input, shape index: {}]
  %s2 = inlined_call_operand.vmem [shape: bf16[32,32], index: 2, kind: input, shape index: {}]
  %s3 = inlined_call_operand.vmem [shape: f32[1,32], index: 3, kind: input, shape index: {}]
  %s4 = inlined_call_operand.vmem [shape: bf16[32,32], index: 4, kind: input, shape index: {}]
  %s5 = inlined_call_operand.vmem [shape: f32[1,32], index: 5, kind: input, shape index: {}]
  %s6 = inlined_call_operand.vmem [shape: f32[64,96], index: 6, kind: output, shape index: {}]
  %s7 = sld [smem:[#allocation0]]
  $region57: #{entity_pooling_forward.1} parent=0
    _
  %s9 = ssub.s32 1, %s7
  %s10 = scalar_select 0, %s9, %s7
  loop: start=0, step=1, limit=4
  $region2: #{entity_pooling_forward.1} parent=0 // loop_pre_header
    _
  $region3: #{entity_pooling_forward.1} parent=0 // loop_header
    %s12 = sphi 0, %s16
    %p13 = scmp.ge.s32.totalorder %s12, 4
    %s22 = sphi 0, %s24
    %s25 = sphi 0, %s22
    %s26 = sphi 0, %s25
    %s42 = sphi 0, %s26
    %s48 = sphi 0, %s50
    %s51 = sphi 0, %s48
    %s52 = sphi 0, %s51
    %s68 = sphi 0, %s52
    %s72 = sphi 0, %s72
    %s74 = sphi 0, %s72
    %s75 = sphi 0, %s74
    %s89 = sphi 0, %s75
    %s93 = sphi 0, %s93
    %s95 = sphi 0, %s93
    %s96 = sphi 0, %s95
    %s110 = sphi 0, %s96
    %s114 = sphi 0, %s114
    %s116 = sphi 0, %s114
    %s117 = sphi 0, %s116
    %s131 = sphi 0, %s117
    %s135 = sphi 0, %s135
    %s137 = sphi 0, %s135
    %s138 = sphi 0, %s137
    %s152 = sphi 0, %s138
    %s158 = sphi 0, %s160
    %s161 = sphi 0, %s158
    %s162 = sphi 0, %s161
    %s178 = sphi 0, %s162
  $region4: #{entity_pooling_forward.1} parent=0 // loop_header_branch
    %15 = sbr.rel (%p13) target = $region8
  $region5: #{entity_pooling_forward.1} parent=0 // loop_body
    %s17 = ssub.s32 %s12, 1
    %s18 = ssub.s32 %s12, 2
    %s19 = sadd.s32 %s12, 1
    %s20 = ssub.s32 %s12, %s19
    %p21 = scmp.eq.s32.totalorder %s20, 0
    %s23 = sadd.s32 %s22, 1
    %s24 = scalar_select %p21, %s22, %s23
    %p27 = pneg %p21
    %p28 = scmp.eq.s32.totalorder %s12, 1
    %p29 = por %p27, %p28
    %p30 = scmp.ne.s32.totalorder %s22, %s25
    %p31 = scmp.eq.s32.totalorder %s12, 0
    %p32 = por %p30, %p31
    %p33 = scmp.ne.s32.totalorder %s22, %s25
    %p34 = scmp.eq.s32.totalorder %s17, 1
    %p35 = por %p33, %p34
    %p36 = scmp.ne.s32.totalorder %s25, %s26
    %p37 = scmp.eq.s32.totalorder %s17, 0
    %p38 = por %p36, %p37
    %p39 = scmp.ne.s32.totalorder %s25, %s26
    %p40 = scmp.eq.s32.totalorder %s18, 1
    %p41 = por %p39, %p40
    %p43 = scmp.ne.s32.totalorder %s26, %s42
    %p44 = scmp.eq.s32.totalorder %s18, 0
    %p45 = por %p43, %p44
    %s46 = ssub.s32 %s12, %s19
    %p47 = scmp.eq.s32.totalorder %s46, 0
    %s49 = sadd.s32 %s48, 1
    %s50 = scalar_select %p47, %s48, %s49
    %p53 = pneg %p47
    %p54 = scmp.eq.s32.totalorder %s12, 1
    %p55 = por %p53, %p54
    %p56 = scmp.ne.s32.totalorder %s48, %s51
    %p57 = scmp.eq.s32.totalorder %s12, 0
    %p58 = por %p56, %p57
    %p59 = scmp.ne.s32.totalorder %s48, %s51
    %p60 = scmp.eq.s32.totalorder %s17, 1
    %p61 = por %p59, %p60
    %p62 = scmp.ne.s32.totalorder %s51, %s52
    %p63 = scmp.eq.s32.totalorder %s17, 0
    %p64 = por %p62, %p63
    %p65 = scmp.ne.s32.totalorder %s51, %s52
    %p66 = scmp.eq.s32.totalorder %s18, 1
    %p67 = por %p65, %p66
    %p69 = scmp.ne.s32.totalorder %s52, %s68
    %p70 = scmp.eq.s32.totalorder %s18, 0
    %p71 = por %p69, %p70
    %s73 = sadd.s32 %s72, 1
    %p76 = scmp.eq.s32.totalorder %s12, 1
    %p77 = scmp.ne.s32.totalorder %s72, %s74
    %p78 = scmp.eq.s32.totalorder %s12, 0
    %p79 = por %p77, %p78
    %p80 = scmp.ne.s32.totalorder %s72, %s74
    %p81 = scmp.eq.s32.totalorder %s17, 1
    %p82 = por %p80, %p81
    %p83 = scmp.ne.s32.totalorder %s74, %s75
    %p84 = scmp.eq.s32.totalorder %s17, 0
    %p85 = por %p83, %p84
    %p86 = scmp.ne.s32.totalorder %s74, %s75
    %p87 = scmp.eq.s32.totalorder %s18, 1
    %p88 = por %p86, %p87
    %p90 = scmp.ne.s32.totalorder %s75, %s89
    %p91 = scmp.eq.s32.totalorder %s18, 0
    %p92 = por %p90, %p91
    %s94 = sadd.s32 %s93, 1
    %p97 = scmp.eq.s32.totalorder %s12, 1
    %p98 = scmp.ne.s32.totalorder %s93, %s95
    %p99 = scmp.eq.s32.totalorder %s12, 0
    %p100 = por %p98, %p99
    %p101 = scmp.ne.s32.totalorder %s93, %s95
    %p102 = scmp.eq.s32.totalorder %s17, 1
    %p103 = por %p101, %p102
    %p104 = scmp.ne.s32.totalorder %s95, %s96
    %p105 = scmp.eq.s32.totalorder %s17, 0
    %p106 = por %p104, %p105
    %p107 = scmp.ne.s32.totalorder %s95, %s96
    %p108 = scmp.eq.s32.totalorder %s18, 1
    %p109 = por %p107, %p108
    %p111 = scmp.ne.s32.totalorder %s96, %s110
    %p112 = scmp.eq.s32.totalorder %s18, 0
    %p113 = por %p111, %p112
    %s115 = sadd.s32 %s114, 1
    %p118 = scmp.eq.s32.totalorder %s12, 1
    %p119 = scmp.ne.s32.totalorder %s114, %s116
    %p120 = scmp.eq.s32.totalorder %s12, 0
    %p121 = por %p119, %p120
    %p122 = scmp.ne.s32.totalorder %s114, %s116
    %p123 = scmp.eq.s32.totalorder %s17, 1
    %p124 = por %p122, %p123
    %p125 = scmp.ne.s32.totalorder %s116, %s117
    %p126 = scmp.eq.s32.totalorder %s17, 0
    %p127 = por %p125, %p126
    %p128 = scmp.ne.s32.totalorder %s116, %s117
    %p129 = scmp.eq.s32.totalorder %s18, 1
    %p130 = por %p128, %p129
    %p132 = scmp.ne.s32.totalorder %s117, %s131
    %p133 = scmp.eq.s32.totalorder %s18, 0
    %p134 = por %p132, %p133
    %s136 = sadd.s32 %s135, 1
    %p139 = scmp.eq.s32.totalorder %s12, 1
    %p140 = scmp.ne.s32.totalorder %s135, %s137
    %p141 = scmp.eq.s32.totalorder %s12, 0
    %p142 = por %p140, %p141
    %p143 = scmp.ne.s32.totalorder %s135, %s137
    %p144 = scmp.eq.s32.totalorder %s17, 1
    %p145 = por %p143, %p144
    %p146 = scmp.ne.s32.totalorder %s137, %s138
    %p147 = scmp.eq.s32.totalorder %s17, 0
    %p148 = por %p146, %p147
    %p149 = scmp.ne.s32.totalorder %s137, %s138
    %p150 = scmp.eq.s32.totalorder %s18, 1
    %p151 = por %p149, %p150
    %p153 = scmp.ne.s32.totalorder %s138, %s152
    %p154 = scmp.eq.s32.totalorder %s18, 0
    %p155 = por %p153, %p154
    %s156 = ssub.s32 %s12, %s19
    %p157 = scmp.eq.s32.totalorder %s156, 0
    %s159 = sadd.s32 %s158, 1
    %s160 = scalar_select %p157, %s158, %s159
    %p163 = pneg %p157
    %p164 = scmp.eq.s32.totalorder %s12, 1
    %p165 = por %p163, %p164
    %p166 = scmp.ne.s32.totalorder %s158, %s161
    %p167 = scmp.eq.s32.totalorder %s12, 0
    %p168 = por %p166, %p167
    %p169 = scmp.ne.s32.totalorder %s158, %s161
    %p170 = scmp.eq.s32.totalorder %s17, 1
    %p171 = por %p169, %p170
    %p172 = scmp.ne.s32.totalorder %s161, %s162
    %p173 = scmp.eq.s32.totalorder %s17, 0
    %p174 = por %p172, %p173
    %p175 = scmp.ne.s32.totalorder %s161, %s162
    %p176 = scmp.eq.s32.totalorder %s18, 1
    %p177 = por %p175, %p176
    %p179 = scmp.ne.s32.totalorder %s162, %s178
    %p180 = scmp.eq.s32.totalorder %s18, 0
    %p181 = por %p179, %p180
    %p182 = scmp.le.s32.totalorder 1, %s12
    %p183 = scmp.lt.s32.totalorder %s12, 3
    %p184 = pnand %p182, %p183
    %p185 = pneg %p184
    // Predicated region
    $region9: #{entity_pooling_forward.1} parent=5 // pred_check
      _
    $region10: #{entity_pooling_forward.1} parent=5 // pred_check_branch
      %187 = sbr.rel (%p184) target = $region12
    $region11: #{entity_pooling_forward.1} parent=5 // pred_region
      %s188 = ssub.s32 %s12, 1
      // Predicated region
      $region13: #{entity_pooling_forward.1} parent=11 // pred_check
        %p189 = pneg %p85
      $region14: #{entity_pooling_forward.1} parent=11 // pred_check_branch
        %191 = sbr.rel (%p189) target = $region16
      $region15: #{entity_pooling_forward.1} parent=11 // pred_region
        _
      $region16: #{entity_pooling_forward.1} parent=11 // pred_fallthru
        _
      // Predicated region
      $region17: #{entity_pooling_forward.1} parent=11 // pred_check
        %p192 = pneg %p106
      $region18: #{entity_pooling_forward.1} parent=11 // pred_check_branch
        %194 = sbr.rel (%p192) target = $region20
      $region19: #{entity_pooling_forward.1} parent=11 // pred_region
        _
      $region20: #{entity_pooling_forward.1} parent=11 // pred_fallthru
        _
      // Predicated region
      $region21: #{entity_pooling_forward.1} parent=11 // pred_check
        %p195 = pneg %p127
      $region22: #{entity_pooling_forward.1} parent=11 // pred_check_branch
        %197 = sbr.rel (%p195) target = $region24
      $region23: #{entity_pooling_forward.1} parent=11 // pred_region
        _
      $region24: #{entity_pooling_forward.1} parent=11 // pred_fallthru
        _
      // Predicated region
      $region25: #{entity_pooling_forward.1} parent=11 // pred_check
        %p198 = pneg %p148
      $region26: #{entity_pooling_forward.1} parent=11 // pred_check_branch
        %200 = sbr.rel (%p198) target = $region28
      $region27: #{entity_pooling_forward.1} parent=11 // pred_region
        _
      $region28: #{entity_pooling_forward.1} parent=11 // pred_fallthru
        _
    $region12: #{entity_pooling_forward.1} parent=5 // pred_fallthru
      _
    %p201 = scmp.lt.s32.totalorder %s12, 2
    // Predicated region
    $region29: #{entity_pooling_forward.1} parent=5 // pred_check
      %p202 = pneg %p201
    $region30: #{entity_pooling_forward.1} parent=5 // pred_check_branch
      %204 = sbr.rel (%p202) target = $region32
    $region31: #{entity_pooling_forward.1} parent=5 // pred_region
      // Predicated region
      $region33: #{entity_pooling_forward.1} parent=31 // pred_check
        %p205 = pneg %p32
      $region34: #{entity_pooling_forward.1} parent=31 // pred_check_branch
        %207 = sbr.rel (%p205) target = $region36
      $region35: #{entity_pooling_forward.1} parent=31 // pred_region
        %s208 = smul.u32 4, %s12
        %p209 = scmp.lt.s32.totalorder %s208, 7
        %s210 = scalar_select %p209, %s208, 7
        %s211 = smul.addr %s210, 2
        %s212 = smul.addr %s211, 8
        %s213 = scalar_lea.vmem %s0, %s212
        %s214 = smul.u32 4, %s12
      $region36: #{entity_pooling_forward.1} parent=31 // pred_fallthru
        _
      // Predicated region
      $region37: #{entity_pooling_forward.1} parent=31 // pred_check
        %p215 = pneg %p58
      $region38: #{entity_pooling_forward.1} parent=31 // pred_check_branch
        %217 = sbr.rel (%p215) target = $region40
      $region39: #{entity_pooling_forward.1} parent=31 // pred_region
        %s218 = smul.u32 4, %s12
        %p219 = scmp.lt.s32.totalorder %s218, 7
        %s220 = scalar_select %p219, %s218, 7
        %s221 = smul.addr %s220, 4
        %s222 = scalar_lea.vmem %s1, %s221
        %s223 = smul.u32 4, %s12
      $region40: #{entity_pooling_forward.1} parent=31 // pred_fallthru
        _
    $region32: #{entity_pooling_forward.1} parent=5 // pred_fallthru
      _
    %p224 = scmp.le.s32.totalorder 1, %s12
    %p225 = scmp.lt.s32.totalorder %s12, 3
    %p226 = pnand %p224, %p225
    %p227 = pneg %p226
    // Predicated region
    $region41: #{entity_pooling_forward.1} parent=5 // pred_check
      _
    $region42: #{entity_pooling_forward.1} parent=5 // pred_check_branch
      %229 = sbr.rel (%p226) target = $region44
    $region43: #{entity_pooling_forward.1} parent=5 // pred_region
      %s230 = ssub.s32 %s12, 1
      %s231 = smul.u32 4, %s17
      %p232 = scmp.lt.s32.totalorder %s231, 7
      %s233 = scalar_select %p232, %s231, 7
      %s234 = smul.addr %s233, 2
      %s235 = smul.addr %s234, 8
      %s236 = scalar_lea.vmem %s0, %s235
      %p237 = pneg %p38
      %p238 = pneg %p35
      %s239 = smul.u32 4, %s17
      %p240 = scmp.lt.s32.totalorder %s239, 7
      %s241 = scalar_select %p240, %s239, 7
      %s242 = smul.addr %s241, 4
      %s243 = scalar_lea.vmem %s1, %s242
      %p244 = pneg %p64
      %p245 = pneg %p61
      %p246 = pneg %p85
      %p247 = pneg %p82
      %p248 = pneg %p106
      %p249 = pneg %p103
      %p250 = pneg %p127
      %p251 = pneg %p124
      %p252 = pneg %p148
      %p253 = pneg %p145
      %p254 = pneg %p174
      %p255 = pneg %p171
      %s256 = smul.u32 4, %s17
      %p257 = scmp.lt.s32.totalorder %s256, 7
      %s258 = scalar_select %p257, %s256, 7
      %s259 = smul.addr %s258, 8
      %s260 = scalar_lea.vmem %s6, %s259
      %s261 = smul.u32 4, %s17
      %p262 = scmp.lt.s32.totalorder %s261, 7
      %s263 = scalar_select %p262, %s261, 7
      %s264 = smul.addr %s263, 2
      %s265 = smul.addr %s264, 8
      %s266 = scalar_lea.vmem %s0, %s265
      %s267 = smul.u32 4, %s17
      %s268 = smul.u32 4, %s17
      %p269 = scmp.lt.s32.totalorder %s268, 7
      %s270 = scalar_select %p269, %s268, 7
      %s271 = smul.addr %s270, 4
      %s272 = scalar_lea.vmem %s1, %s271
      %s273 = smul.u32 4, %s17
      %s274 = smul.u32 4, %s17
      %p275 = scmp.lt.s32.totalorder %s274, 7
      %s276 = scalar_select %p275, %s274, 7
      %s277 = smul.addr %s276, 8
      %s278 = scalar_lea.vmem %s6, %s277
      %s279 = smul.u32 4, %s17
      %v281 = vld [vmem:[%s2] sm:$0xf]
      %v282 = vld [vmem:[%s2 + $0x4] sm:$0xf]
      %v283 = vld [vmem:[%s2 + $0x8] sm:$0xf]
      %v284 = vld [vmem:[%s2 + $0xc] sm:$0xf]
      %v285 = vld [vmem:[%s4] sm:$0xf]
      %v286 = vld [vmem:[%s4 + $0x4] sm:$0xf]
      %v287 = vld [vmem:[%s4 + $0x8] sm:$0xf]
      %v288 = vld [vmem:[%s4 + $0xc] sm:$0xf]
      %v289 = vld [vmem:[%s3] sm:$0x1]
      %v290 = vld [vmem:[%s5] sm:$0x1]
      %v291 = vld [vmem:[%s266] sm:$0xff]
      %v292 = vld [vmem:[%s266 + $0x10] sm:$0xff]
      %v293 = vld [vmem:[%s266 + $0x20] sm:$0xff]
      %v294 = vld [vmem:[%s266 + $0x30] sm:$0xff]
      %v295 = vpack.c.bf16 %v292, %v291
      %v296 = vpack.c.bf16 %v294, %v293
      %v298 = vlaneseq
      %v299 = vshrl.u32 %v298, 7
      %v300 = vsub.s32 0, %v299
      %v301 = vrot.slane %v289, %v300
      %v307 = vunpack.c.l.b16 %v281
      %v308 = vunpack.c.l.b16 %v282
      %v309 = vunpack.c.l.b16 %v283
      %v310 = vunpack.c.l.b16 %v284
      %v311 = vpack.c.b16 %v308, %v307
      %v312 = vpack.c.b16 %v310, %v309
      %vm315 = vcmask 261120
      %v317 = vsel %vm315, %v295, 0
      %v320 = vsel %vm315, %v296, 0
      %322 = vmatprep.subr.bf16.mxu0 0
      %323 = vmatpush1.bf16.msra.mxu0 %v311
      %324 = vmatprep.subr.bf16.mxu0 0
      %325 = vmatpush1.bf16.msra.mxu0 %v312
      %326 = vmatprep.subr.bf16.mxu0 0
      %327 = vmatpush1.bf16.msra.mxu0 0
      %328 = vmatprep.subr.bf16.mxu0 0
      %329 = vmatpush1.bf16.msra.mxu0 0
      %330 = vmatprep.subr.bf16.mxu0 0
      %331 = vmatpush1.bf16.msra.mxu0 0
      %332 = vmatprep.subr.bf16.mxu0 0
      %333 = vmatpush1.bf16.msra.mxu0 0
      %334 = vmatprep.subr.bf16.mxu0 0
      %335 = vmatpush1.bf16.msra.mxu0 0
      %336 = vmatprep.subr.bf16.mxu0 0
      %337 = vmatpush1.bf16.msra.mxu0 0
      %338 = vmatprep.subr.bf16.mxu0 0
      %339 = vmatpush1.bf16.msra.mxu0 0
      %340 = vmatprep.subr.bf16.mxu0 0
      %341 = vmatpush1.bf16.msra.mxu0 0
      %342 = vmatprep.subr.bf16.mxu0 0
      %343 = vmatpush1.bf16.msra.mxu0 0
      %344 = vmatprep.subr.bf16.mxu0 0
      %345 = vmatpush1.bf16.msra.mxu0 0
      %346 = vmatprep.subr.bf16.mxu0 0
      %347 = vmatpush1.bf16.msra.mxu0 0
      %348 = vmatprep.subr.bf16.mxu0 0
      %349 = vmatpush1.bf16.msra.mxu0 0
      %350 = vmatprep.subr.bf16.mxu0 0
      %351 = vmatpush1.bf16.msra.mxu0 0
      %352 = vmatprep.subr.bf16.mxu0 0
      %353 = vmatpush1.bf16.msra.mxu0 0
      %354 = vmatprep.mubr.bf16.mxu0 0
      %355 = vmatmul.mubr.bf16.gmra.mrb[0].mxu0 %v317
      %v356 = vpop.f32.mrb[0].mxu0
      %v357 = vadd.f32 %v301, %v356
      %v358 = vpop.f32.mrb[0].mxu0
      %v359 = vpop.f32.mrb[0].mxu0
      %v360 = vadd.f32 %v301, %v359
      %v361 = vpop.f32.mrb[0].mxu0
      %362 = vmatprep.mubr.bf16.mxu0 0
      %363 = vmatmul.mubr.bf16.gmra.mrb[0].mxu0 %v320
      %v364 = vpop.f32.mrb[0].mxu0
      %v365 = vadd.f32 %v301, %v364
      %v366 = vpop.f32.mrb[0].mxu0
      %v367 = vpop.f32.mrb[0].mxu0
      %v368 = vadd.f32 %v301, %v367
      %v369 = vpop.f32.mrb[0].mxu0
      %370 = vdwg.mxu0
      %373 = vrot.lane.b32.xlu0 %v295, 96
      %v374 = vpop.permute.xlu0 %373
      %375 = vrot.lane.b32.xlu0 %v296, 96
      %v376 = vpop.permute.xlu0 %375
      %v378 = vsel %vm315, %v374, 0
      %v381 = vsel %vm315, %v376, 0
      %383 = vmatprep.subr.bf16.mxu0 0
      %384 = vmatpush1.bf16.msra.mxu0 %v311
      %385 = vmatprep.subr.bf16.mxu0 0
      %386 = vmatpush1.bf16.msra.mxu0 %v312
      %387 = vmatprep.subr.bf16.mxu0 0
      %388 = vmatpush1.bf16.msra.mxu0 0
      %389 = vmatprep.subr.bf16.mxu0 0
      %390 = vmatpush1.bf16.msra.mxu0 0
      %391 = vmatprep.subr.bf16.mxu0 0
      %392 = vmatpush1.bf16.msra.mxu0 0
      %393 = vmatprep.subr.bf16.mxu0 0
      %394 = vmatpush1.bf16.msra.mxu0 0
      %395 = vmatprep.subr.bf16.mxu0 0
      %396 = vmatpush1.bf16.msra.mxu0 0
      %397 = vmatprep.subr.bf16.mxu0 0
      %398 = vmatpush1.bf16.msra.mxu0 0
      %399 = vmatprep.subr.bf16.mxu0 0
      %400 = vmatpush1.bf16.msra.mxu0 0
      %401 = vmatprep.subr.bf16.mxu0 0
      %402 = vmatpush1.bf16.msra.mxu0 0
      %403 = vmatprep.subr.bf16.mxu0 0
      %404 = vmatpush1.bf16.msra.mxu0 0
      %405 = vmatprep.subr.bf16.mxu0 0
      %406 = vmatpush1.bf16.msra.mxu0 0
      %407 = vmatprep.subr.bf16.mxu0 0
      %408 = vmatpush1.bf16.msra.mxu0 0
      %409 = vmatprep.subr.bf16.mxu0 0
      %410 = vmatpush1.bf16.msra.mxu0 0
      %411 = vmatprep.subr.bf16.mxu0 0
      %412 = vmatpush1.bf16.msra.mxu0 0
      %413 = vmatprep.subr.bf16.mxu0 0
      %414 = vmatpush1.bf16.msra.mxu0 0
      %415 = vmatprep.mubr.bf16.mxu0 0
      %416 = vmatmul.mubr.bf16.gmra.mrb[0].mxu0 %v378
      %v417 = vpop.f32.mrb[0].mxu0
      %v418 = vadd.f32 %v301, %v417
      %v419 = vpop.f32.mrb[0].mxu0
      %v420 = vpop.f32.mrb[0].mxu0
      %v421 = vadd.f32 %v301, %v420
      %v422 = vpop.f32.mrb[0].mxu0
      %423 = vmatprep.mubr.bf16.mxu0 0
      %424 = vmatmul.mubr.bf16.gmra.mrb[0].mxu0 %v381
      %v425 = vpop.f32.mrb[0].mxu0
      %v426 = vadd.f32 %v301, %v425
      %v427 = vpop.f32.mrb[0].mxu0
      %v428 = vpop.f32.mrb[0].mxu0
      %v429 = vadd.f32 %v301, %v428
      %v430 = vpop.f32.mrb[0].mxu0
      %431 = vdwg.mxu0
      %432 = vrot.lane.b32.xlu0 %v295, 64
      %v433 = vpop.permute.xlu0 %432
      %434 = vrot.lane.b32.xlu0 %v296, 64
      %v435 = vpop.permute.xlu0 %434
      %v437 = vsel %vm315, %v433, 0
      %v440 = vsel %vm315, %v435, 0
      %442 = vmatprep.subr.bf16.mxu0 0
      %443 = vmatpush1.bf16.msra.mxu0 %v311
      %444 = vmatprep.subr.bf16.mxu0 0
      %445 = vmatpush1.bf16.msra.mxu0 %v312
      %446 = vmatprep.subr.bf16.mxu0 0
      %447 = vmatpush1.bf16.msra.mxu0 0
      %448 = vmatprep.subr.bf16.mxu0 0
      %449 = vmatpush1.bf16.msra.mxu0 0
      %450 = vmatprep.subr.bf16.mxu0 0
      %451 = vmatpush1.bf16.msra.mxu0 0
      %452 = vmatprep.subr.bf16.mxu0 0
      %453 = vmatpush1.bf16.msra.mxu0 0
      %454 = vmatprep.subr.bf16.mxu0 0
      %455 = vmatpush1.bf16.msra.mxu0 0
      %456 = vmatprep.subr.bf16.mxu0 0
      %457 = vmatpush1.bf16.msra.mxu0 0
      %458 = vmatprep.subr.bf16.mxu0 0
      %459 = vmatpush1.bf16.msra.mxu0 0
      %460 = vmatprep.subr.bf16.mxu0 0
      %461 = vmatpush1.bf16.msra.mxu0 0
      %462 = vmatprep.subr.bf16.mxu0 0
      %463 = vmatpush1.bf16.msra.mxu0 0
      %464 = vmatprep.subr.bf16.mxu0 0
      %465 = vmatpush1.bf16.msra.mxu0 0
      %466 = vmatprep.subr.bf16.mxu0 0
      %467 = vmatpush1.bf16.msra.mxu0 0
      %468 = vmatprep.subr.bf16.mxu0 0
      %469 = vmatpush1.bf16.msra.mxu0 0
      %470 = vmatprep.subr.bf16.mxu0 0
      %471 = vmatpush1.bf16.msra.mxu0 0
      %472 = vmatprep.subr.bf16.mxu0 0
      %473 = vmatpush1.bf16.msra.mxu0 0
      %474 = vmatprep.mubr.bf16.mxu0 0
      %475 = vmatmul.mubr.bf16.gmra.mrb[0].mxu0 %v437
      %v476 = vpop.f32.mrb[0].mxu0
      %v477 = vadd.f32 %v301, %v476
      %v478 = vpop.f32.mrb[0].mxu0
      %v479 = vpop.f32.mrb[0].mxu0
      %v480 = vadd.f32 %v301, %v479
      %v481 = vpop.f32.mrb[0].mxu0
      %482 = vmatprep.mubr.bf16.mxu0 0
      %483 = vmatmul.mubr.bf16.gmra.mrb[0].mxu0 %v440
      %v484 = vpop.f32.mrb[0].mxu0
      %v485 = vadd.f32 %v301, %v484
      %v486 = vpop.f32.mrb[0].mxu0
      %v487 = vpop.f32.mrb[0].mxu0
      %v488 = vadd.f32 %v301, %v487
      %v489 = vpop.f32.mrb[0].mxu0
      %490 = vdwg.mxu0
      %491 = vrot.lane.b32.xlu0 %v295, 32
      %v492 = vpop.permute.xlu0 %491
      %493 = vrot.lane.b32.xlu0 %v296, 32
      %v494 = vpop.permute.xlu0 %493
      %v496 = vsel %vm315, %v492, 0
      %v499 = vsel %vm315, %v494, 0
      %501 = vmatprep.subr.bf16.mxu0 0
      %502 = vmatpush1.bf16.msra.mxu0 %v311
      %503 = vmatprep.subr.bf16.mxu0 0
      %504 = vmatpush1.bf16.msra.mxu0 %v312
      %505 = vmatprep.subr.bf16.mxu0 0
      %506 = vmatpush1.bf16.msra.mxu0 0
      %507 = vmatprep.subr.bf16.mxu0 0
      %508 = vmatpush1.bf16.msra.mxu0 0
      %509 = vmatprep.subr.bf16.mxu0 0
      %510 = vmatpush1.bf16.msra.mxu0 0
      %511 = vmatprep.subr.bf16.mxu0 0
      %512 = vmatpush1.bf16.msra.mxu0 0
      %513 = vmatprep.subr.bf16.mxu0 0
      %514 = vmatpush1.bf16.msra.mxu0 0
      %515 = vmatprep.subr.bf16.mxu0 0
      %516 = vmatpush1.bf16.msra.mxu0 0
      %517 = vmatprep.subr.bf16.mxu0 0
      %518 = vmatpush1.bf16.msra.mxu0 0
      %519 = vmatprep.subr.bf16.mxu0 0
      %520 = vmatpush1.bf16.msra.mxu0 0
      %521 = vmatprep.subr.bf16.mxu0 0
      %522 = vmatpush1.bf16.msra.mxu0 0
      %523 = vmatprep.subr.bf16.mxu0 0
      %524 = vmatpush1.bf16.msra.mxu0 0
      %525 = vmatprep.subr.bf16.mxu0 0
      %526 = vmatpush1.bf16.msra.mxu0 0
      %527 = vmatprep.subr.bf16.mxu0 0
      %528 = vmatpush1.bf16.msra.mxu0 0
      %529 = vmatprep.subr.bf16.mxu0 0
      %530 = vmatpush1.bf16.msra.mxu0 0
      %531 = vmatprep.subr.bf16.mxu0 0
      %532 = vmatpush1.bf16.msra.mxu0 0
      %533 = vmatprep.mubr.bf16.mxu0 0
      %534 = vmatmul.mubr.bf16.gmra.mrb[0].mxu0 %v496
      %v535 = vpop.f32.mrb[0].mxu0
      %v536 = vadd.f32 %v301, %v535
      %v537 = vpop.f32.mrb[0].mxu0
      %v538 = vpop.f32.mrb[0].mxu0
      %v539 = vadd.f32 %v301, %v538
      %v540 = vpop.f32.mrb[0].mxu0
      %541 = vmatprep.mubr.bf16.mxu0 0
      %542 = vmatmul.mubr.bf16.gmra.mrb[0].mxu0 %v499
      %v543 = vpop.f32.mrb[0].mxu0
      %v544 = vadd.f32 %v301, %v543
      %v545 = vpop.f32.mrb[0].mxu0
      %v546 = vpop.f32.mrb[0].mxu0
      %v547 = vadd.f32 %v301, %v546
      %v548 = vpop.f32.mrb[0].mxu0
      %549 = vdwg.mxu0
      %v550 = vld [vmem:[%s266 + $0x8] sm:$0xff]
      %v551 = vld [vmem:[%s266 + $0x18] sm:$0xff]
      %v552 = vld [vmem:[%s266 + $0x28] sm:$0xff]
      %v553 = vld [vmem:[%s266 + $0x38] sm:$0xff]
      %v554 = vpack.c.bf16 %v551, %v550
      %v555 = vpack.c.bf16 %v553, %v552
      %v557 = vsel %vm315, %v554, 0
      %v560 = vsel %vm315, %v555, 0
      %562 = vmatprep.subr.bf16.mxu0 0
      %563 = vmatpush1.bf16.msra.mxu0 %v311
      %564 = vmatprep.subr.bf16.mxu0 0
      %565 = vmatpush1.bf16.msra.mxu0 %v312
      %566 = vmatprep.subr.bf16.mxu0 0
      %567 = vmatpush1.bf16.msra.mxu0 0
      %568 = vmatprep.subr.bf16.mxu0 0
      %569 = vmatpush1.bf16.msra.mxu0 0
      %570 = vmatprep.subr.bf16.mxu0 0
      %571 = vmatpush1.bf16.msra.mxu0 0
      %572 = vmatprep.subr.bf16.mxu0 0
      %573 = vmatpush1.bf16.msra.mxu0 0
      %574 = vmatprep.subr.bf16.mxu0 0
      %575 = vmatpush1.bf16.msra.mxu0 0
      %576 = vmatprep.subr.bf16.mxu0 0
      %577 = vmatpush1.bf16.msra.mxu0 0
      %578 = vmatprep.subr.bf16.mxu0 0
      %579 = vmatpush1.bf16.msra.mxu0 0
      %580 = vmatprep.subr.bf16.mxu0 0
      %581 = vmatpush1.bf16.msra.mxu0 0
      %582 = vmatprep.subr.bf16.mxu0 0
      %583 = vmatpush1.bf16.msra.mxu0 0
      %584 = vmatprep.subr.bf16.mxu0 0
      %585 = vmatpush1.bf16.msra.mxu0 0
      %586 = vmatprep.subr.bf16.mxu0 0
      %587 = vmatpush1.bf16.msra.mxu0 0
      %588 = vmatprep.subr.bf16.mxu0 0
      %589 = vmatpush1.bf16.msra.mxu0 0
      %590 = vmatprep.subr.bf16.mxu0 0
      %591 = vmatpush1.bf16.msra.mxu0 0
      %592 = vmatprep.subr.bf16.mxu0 0
      %593 = vmatpush1.bf16.msra.mxu0 0
      %594 = vmatprep.mubr.bf16.mxu0 0
      %595 = vmatmul.mubr.bf16.gmra.mrb[0].mxu0 %v557
      %v596 = vpop.f32.mrb[0].mxu0
      %v597 = vadd.f32 %v301, %v596
      %v598 = vpop.f32.mrb[0].mxu0
      %v599 = vpop.f32.mrb[0].mxu0
      %v600 = vadd.f32 %v301, %v599
      %v601 = vpop.f32.mrb[0].mxu0
      %602 = vmatprep.mubr.bf16.mxu0 0
      %603 = vmatmul.mubr.bf16.gmra.mrb[0].mxu0 %v560
      %v604 = vpop.f32.mrb[0].mxu0
      %v605 = vadd.f32 %v301, %v604
      %v606 = vpop.f32.mrb[0].mxu0
      %v607 = vpop.f32.mrb[0].mxu0
      %v608 = vadd.f32 %v301, %v607
      %v609 = vpop.f32.mrb[0].mxu0
      %610 = vdwg.mxu0
      %613 = vrot.lane.b32.xlu0 %v554, 96
      %v614 = vpop.permute.xlu0 %613
      %615 = vrot.lane.b32.xlu0 %v555, 96
      %v616 = vpop.permute.xlu0 %615
      %v618 = vsel %vm315, %v614, 0
      %v621 = vsel %vm315, %v616, 0
      %623 = vmatprep.subr.bf16.mxu0 0
      %624 = vmatpush1.bf16.msra.mxu0 %v311
      %625 = vmatprep.subr.bf16.mxu0 0
      %626 = vmatpush1.bf16.msra.mxu0 %v312
      %627 = vmatprep.subr.bf16.mxu0 0
      %628 = vmatpush1.bf16.msra.mxu0 0
      %629 = vmatprep.subr.bf16.mxu0 0
      %630 = vmatpush1.bf16.msra.mxu0 0
      %631 = vmatprep.subr.bf16.mxu0 0
      %632 = vmatpush1.bf16.msra.mxu0 0
      %633 = vmatprep.subr.bf16.mxu0 0
      %634 = vmatpush1.bf16.msra.mxu0 0
      %635 = vmatprep.subr.bf16.mxu0 0
      %636 = vmatpush1.bf16.msra.mxu0 0
      %637 = vmatprep.subr.bf16.mxu0 0
      %638 = vmatpush1.bf16.msra.mxu0 0
      %639 = vmatprep.subr.bf16.mxu0 0
      %640 = vmatpush1.bf16.msra.mxu0 0
      %641 = vmatprep.subr.bf16.mxu0 0
      %642 = vmatpush1.bf16.msra.mxu0 0
      %643 = vmatprep.subr.bf16.mxu0 0
      %644 = vmatpush1.bf16.msra.mxu0 0
      %645 = vmatprep.subr.bf16.mxu0 0
      %646 = vmatpush1.bf16.msra.mxu0 0
      %647 = vmatprep.subr.bf16.mxu0 0
      %648 = vmatpush1.bf16.msra.mxu0 0
      %649 = vmatprep.subr.bf16.mxu0 0
      %650 = vmatpush1.bf16.msra.mxu0 0
      %651 = vmatprep.subr.bf16.mxu0 0
      %652 = vmatpush1.bf16.msra.mxu0 0
      %653 = vmatprep.subr.bf16.mxu0 0
      %654 = vmatpush1.bf16.msra.mxu0 0
      %655 = vmatprep.mubr.bf16.mxu0 0
      %656 = vmatmul.mubr.bf16.gmra.mrb[0].mxu0 %v618
      %v657 = vpop.f32.mrb[0].mxu0
      %v658 = vadd.f32 %v301, %v657
      %v659 = vpop.f32.mrb[0].mxu0
      %v660 = vpop.f32.mrb[0].mxu0
      %v661 = vadd.f32 %v301, %v660
      %v662 = vpop.f32.mrb[0].mxu0
      %663 = vmatprep.mubr.bf16.mxu0 0
      %664 = vmatmul.mubr.bf16.gmra.mrb[0].mxu0 %v621
      %v665 = vpop.f32.mrb[0].mxu0
      %v666 = vadd.f32 %v301, %v665
      %v667 = vpop.f32.mrb[0].mxu0
      %v668 = vpop.f32.mrb[0].mxu0
      %v669 = vadd.f32 %v301, %v668
      %v670 = vpop.f32.mrb[0].mxu0
      %671 = vdwg.mxu0
      %v672 = vld [vmem:[%s272] sm:$0xf]
      %v673 = vld [vmem:[%s272 + $0x4] sm:$0xf]
      %v674 = vld [vmem:[%s272 + $0x8] sm:$0xf]
      %v675 = vld [vmem:[%s272 + $0xc] sm:$0xf]
      %v676 = vunpack.c.l.bf16 %v672
      %v677 = vunpack.c.l.bf16 %v673
      %v678 = vunpack.c.l.bf16 %v674
      %v679 = vunpack.c.l.bf16 %v675
      %681 = vset.pattern.permute.xlu0 0
      %682 = vperm.xlu0 %681, %v676
      %v683 = vpop.permute.xlu0 %682
      %686 = vset.pattern.permute.xlu0 0
      %687 = vperm.xlu0 %686, %v677
      %v688 = vpop.permute.xlu0 %687
      %691 = vset.pattern.permute.xlu0 0
      %692 = vperm.xlu0 %691, %v678
      %v693 = vpop.permute.xlu0 %692
      %696 = vset.pattern.permute.xlu0 0
      %697 = vperm.xlu0 %696, %v679
      %v698 = vpop.permute.xlu0 %697
      %v700 = vmul.f32 %v683, %v357
      %v701 = vmul.f32 %v688, %v360
      %v702 = vmul.f32 %v693, %v365
      %v703 = vmul.f32 %v698, %v368
      %704 = vset.pattern.permute.xlu0 1
      %705 = vperm.xlu0 %704, %v676
      %v706 = vpop.permute.xlu0 %705
      %708 = vset.pattern.permute.xlu0 1
      %709 = vperm.xlu0 %708, %v677
      %v710 = vpop.permute.xlu0 %709
      %712 = vset.pattern.permute.xlu0 1
      %713 = vperm.xlu0 %712, %v678
      %v714 = vpop.permute.xlu0 %713
      %716 = vset.pattern.permute.xlu0 1
      %717 = vperm.xlu0 %716, %v679
      %v718 = vpop.permute.xlu0 %717
      %v720 = vmul.f32 %v706, %v418
      %v721 = vmul.f32 %v710, %v421
      %v722 = vmul.f32 %v714, %v426
      %v723 = vmul.f32 %v718, %v429
      %v724 = vmax.f32 %v700, %v720
      %v725 = vmax.f32 %v701, %v721
      %v726 = vmax.f32 %v702, %v722
      %v727 = vmax.f32 %v703, %v723
      %728 = vset.pattern.permute.xlu0 2
      %729 = vperm.xlu0 %728, %v676
      %v730 = vpop.permute.xlu0 %729
      %732 = vset.pattern.permute.xlu0 2
      %733 = vperm.xlu0 %732, %v677
      %v734 = vpop.permute.xlu0 %733
      %736 = vset.pattern.permute.xlu0 2
      %737 = vperm.xlu0 %736, %v678
      %v738 = vpop.permute.xlu0 %737
      %740 = vset.pattern.permute.xlu0 2
      %741 = vperm.xlu0 %740, %v679
      %v742 = vpop.permute.xlu0 %741
      %v744 = vmul.f32 %v730, %v477
      %v745 = vmul.f32 %v734, %v480
      %v746 = vmul.f32 %v738, %v485
      %v747 = vmul.f32 %v742, %v488
      %v748 = vmax.f32 %v724, %v744
      %v749 = vmax.f32 %v725, %v745
      %v750 = vmax.f32 %v726, %v746
      %v751 = vmax.f32 %v727, %v747
      %752 = vset.pattern.permute.xlu0 3
      %753 = vperm.xlu0 %752, %v676
      %v754 = vpop.permute.xlu0 %753
      %756 = vset.pattern.permute.xlu0 3
      %757 = vperm.xlu0 %756, %v677
      %v758 = vpop.permute.xlu0 %757
      %760 = vset.pattern.permute.xlu0 3
      %761 = vperm.xlu0 %760, %v678
      %v762 = vpop.permute.xlu0 %761
      %764 = vset.pattern.permute.xlu0 3
      %765 = vperm.xlu0 %764, %v679
      %v766 = vpop.permute.xlu0 %765
      %v768 = vmul.f32 %v754, %v536
      %v769 = vmul.f32 %v758, %v539
      %v770 = vmul.f32 %v762, %v544
      %v771 = vmul.f32 %v766, %v547
      %v772 = vmax.f32 %v748, %v768
      %v773 = vmax.f32 %v749, %v769
      %v774 = vmax.f32 %v750, %v770
      %v775 = vmax.f32 %v751, %v771
      %776 = vset.pattern.permute.xlu0 4
      %777 = vperm.xlu0 %776, %v676
      %v778 = vpop.permute.xlu0 %777
      %780 = vset.pattern.permute.xlu0 4
      %781 = vperm.xlu0 %780, %v677
      %v782 = vpop.permute.xlu0 %781
      %784 = vset.pattern.permute.xlu0 4
      %785 = vperm.xlu0 %784, %v678
      %v786 = vpop.permute.xlu0 %785
      %788 = vset.pattern.permute.xlu0 4
      %789 = vperm.xlu0 %788, %v679
      %v790 = vpop.permute.xlu0 %789
      %v792 = vmul.f32 %v778, %v597
      %v793 = vmul.f32 %v782, %v600
      %v794 = vmul.f32 %v786, %v605
      %v795 = vmul.f32 %v790, %v608
      %v796 = vmax.f32 %v772, %v792
      %v797 = vmax.f32 %v773, %v793
      %v798 = vmax.f32 %v774, %v794
      %v799 = vmax.f32 %v775, %v795
      %800 = vset.pattern.permute.xlu0 5
      %801 = vperm.xlu0 %800, %v676
      %v802 = vpop.permute.xlu0 %801
      %804 = vset.pattern.permute.xlu0 5
      %805 = vperm.xlu0 %804, %v677
      %v806 = vpop.permute.xlu0 %805
      %808 = vset.pattern.permute.xlu0 5
      %809 = vperm.xlu0 %808, %v678
      %v810 = vpop.permute.xlu0 %809
      %812 = vset.pattern.permute.xlu0 5
      %813 = vperm.xlu0 %812, %v679
      %v814 = vpop.permute.xlu0 %813
      %v816 = vmul.f32 %v802, %v658
      %v817 = vmul.f32 %v806, %v661
      %v818 = vmul.f32 %v810, %v666
      %v819 = vmul.f32 %v814, %v669
      %v820 = vmax.f32 %v796, %v816
      %v821 = vmax.f32 %v797, %v817
      %v822 = vmax.f32 %v798, %v818
      %v823 = vmax.f32 %v799, %v819
      %v824 = vpack.c.bf16 %v821, %v820
      %v825 = vpack.c.bf16 %v823, %v822
      %v827 = vlaneseq
      %v828 = vshrl.u32 %v827, 7
      %v829 = vsub.s32 0, %v828
      %v830 = vrot.slane %v290, %v829
      %v836 = vunpack.c.l.b16 %v285
      %v837 = vunpack.c.l.b16 %v286
      %v838 = vunpack.c.l.b16 %v287
      %v839 = vunpack.c.l.b16 %v288
      %v840 = vpack.c.b16 %v837, %v836
      %v841 = vpack.c.b16 %v839, %v838
      %v845 = vsel %vm315, %v824, 0
      %v848 = vsel %vm315, %v825, 0
      %850 = vmatprep.subr.bf16.mxu0 0
      %851 = vmatpush1.bf16.msra.mxu0 %v840
      %852 = vmatprep.subr.bf16.mxu0 0
      %853 = vmatpush1.bf16.msra.mxu0 %v841
      %854 = vmatprep.subr.bf16.mxu0 0
      %855 = vmatpush1.bf16.msra.mxu0 0
      %856 = vmatprep.subr.bf16.mxu0 0
      %857 = vmatpush1.bf16.msra.mxu0 0
      %858 = vmatprep.subr.bf16.mxu0 0
      %859 = vmatpush1.bf16.msra.mxu0 0
      %860 = vmatprep.subr.bf16.mxu0 0
      %861 = vmatpush1.bf16.msra.mxu0 0
      %862 = vmatprep.subr.bf16.mxu0 0
      %863 = vmatpush1.bf16.msra.mxu0 0
      %864 = vmatprep.subr.bf16.mxu0 0
      %865 = vmatpush1.bf16.msra.mxu0 0
      %866 = vmatprep.subr.bf16.mxu0 0
      %867 = vmatpush1.bf16.msra.mxu0 0
      %868 = vmatprep.subr.bf16.mxu0 0
      %869 = vmatpush1.bf16.msra.mxu0 0
      %870 = vmatprep.subr.bf16.mxu0 0
      %871 = vmatpush1.bf16.msra.mxu0 0
      %872 = vmatprep.subr.bf16.mxu0 0
      %873 = vmatpush1.bf16.msra.mxu0 0
      %874 = vmatprep.subr.bf16.mxu0 0
      %875 = vmatpush1.bf16.msra.mxu0 0
      %876 = vmatprep.subr.bf16.mxu0 0
      %877 = vmatpush1.bf16.msra.mxu0 0
      %878 = vmatprep.subr.bf16.mxu0 0
      %879 = vmatpush1.bf16.msra.mxu0 0
      %880 = vmatprep.subr.bf16.mxu0 0
      %881 = vmatpush1.bf16.msra.mxu0 0
      %882 = vmatprep.mubr.bf16.mxu0 0
      %883 = vmatmul.mubr.bf16.gmra.mrb[0].mxu0 %v845
      %v884 = vpop.f32.mrb[0].mxu0
      %v885 = vadd.f32 %v830, %v884
      %v886 = vpop.f32.mrb[0].mxu0
      %v887 = vpop.f32.mrb[0].mxu0
      %v888 = vadd.f32 %v830, %v887
      %v889 = vpop.f32.mrb[0].mxu0
      %890 = vmatprep.mubr.bf16.mxu0 0
      %891 = vmatmul.mubr.bf16.gmra.mrb[0].mxu0 %v848
      %v892 = vpop.f32.mrb[0].mxu0
      %v893 = vadd.f32 %v830, %v892
      %v894 = vpop.f32.mrb[0].mxu0
      %v895 = vpop.f32.mrb[0].mxu0
      %v896 = vadd.f32 %v830, %v895
      %v897 = vpop.f32.mrb[0].mxu0
      %898 = vdwg.mxu0
      %899 = vset.pattern.permute.xlu0 18
      %900 = vperm.xlu0 %899, %v676
      %v901 = vpop.permute.xlu0 %900
      %903 = vset.pattern.permute.xlu0 18
      %904 = vperm.xlu0 %903, %v677
      %v905 = vpop.permute.xlu0 %904
      %907 = vset.pattern.permute.xlu0 18
      %908 = vperm.xlu0 %907, %v678
      %v909 = vpop.permute.xlu0 %908
      %911 = vset.pattern.permute.xlu0 18
      %912 = vperm.xlu0 %911, %v679
      %v913 = vpop.permute.xlu0 %912
      %v915 = vmul.f32 %v885, %v901
      %v916 = vmul.f32 %v888, %v905
      %v917 = vmul.f32 %v893, %v909
      %v918 = vmul.f32 %v896, %v913
      %919 = vst.msk [vmem:[%s278] sm:$0xff] %vm315, %v915
      %920 = vst.msk [vmem:[%s278 + $0x8] sm:$0xff] %vm315, %v916
      %921 = vst.msk [vmem:[%s278 + $0x10] sm:$0xff] %vm315, %v917
      %922 = vst.msk [vmem:[%s278 + $0x18] sm:$0xff] %vm315, %v918
      %v923 = vld [vmem:[%s272] sm:$0xf]
      %v924 = vld [vmem:[%s272 + $0x4] sm:$0xf]
      %v925 = vld [vmem:[%s272 + $0x8] sm:$0xf]
      %v926 = vld [vmem:[%s272 + $0xc] sm:$0xf]
      %v927 = vunpack.c.l.bf16 %v923
      %v928 = vunpack.c.l.bf16 %v924
      %v929 = vunpack.c.l.bf16 %v925
      %v930 = vunpack.c.l.bf16 %v926
      %932 = vset.pattern.permute.xlu0 6
      %933 = vperm.xlu0 %932, %v927
      %v934 = vpop.permute.xlu0 %933
      %937 = vset.pattern.permute.xlu0 6
      %938 = vperm.xlu0 %937, %v928
      %v939 = vpop.permute.xlu0 %938
      %942 = vset.pattern.permute.xlu0 6
      %943 = vperm.xlu0 %942, %v929
      %v944 = vpop.permute.xlu0 %943
      %947 = vset.pattern.permute.xlu0 6
      %948 = vperm.xlu0 %947, %v930
      %v949 = vpop.permute.xlu0 %948
      %v951 = vmul.f32 %v934, %v357
      %v952 = vmul.f32 %v939, %v360
      %v953 = vmul.f32 %v944, %v365
      %v954 = vmul.f32 %v949, %v368
      %955 = vset.pattern.permute.xlu0 7
      %956 = vperm.xlu0 %955, %v927
      %v957 = vpop.permute.xlu0 %956
      %959 = vset.pattern.permute.xlu0 7
      %960 = vperm.xlu0 %959, %v928
      %v961 = vpop.permute.xlu0 %960
      %963 = vset.pattern.permute.xlu0 7
      %964 = vperm.xlu0 %963, %v929
      %v965 = vpop.permute.xlu0 %964
      %967 = vset.pattern.permute.xlu0 7
      %968 = vperm.xlu0 %967, %v930
      %v969 = vpop.permute.xlu0 %968
      %v971 = vmul.f32 %v957, %v418
      %v972 = vmul.f32 %v961, %v421
      %v973 = vmul.f32 %v965, %v426
      %v974 = vmul.f32 %v969, %v429
      %v975 = vmax.f32 %v951, %v971
      %v976 = vmax.f32 %v952, %v972
      %v977 = vmax.f32 %v953, %v973
      %v978 = vmax.f32 %v954, %v974
      %979 = vset.pattern.permute.xlu0 8
      %980 = vperm.xlu0 %979, %v927
      %v981 = vpop.permute.xlu0 %980
      %983 = vset.pattern.permute.xlu0 8
      %984 = vperm.xlu0 %983, %v928
      %v985 = vpop.permute.xlu0 %984
      %987 = vset.pattern.permute.xlu0 8
      %988 = vperm.xlu0 %987, %v929
      %v989 = vpop.permute.xlu0 %988
      %991 = vset.pattern.permute.xlu0 8
      %992 = vperm.xlu0 %991, %v930
      %v993 = vpop.permute.xlu0 %992
      %v995 = vmul.f32 %v981, %v477
      %v996 = vmul.f32 %v985, %v480
      %v997 = vmul.f32 %v989, %v485
      %v998 = vmul.f32 %v993, %v488
      %v999 = vmax.f32 %v975, %v995
      %v1000 = vmax.f32 %v976, %v996
      %v1001 = vmax.f32 %v977, %v997
      %v1002 = vmax.f32 %v978, %v998
      %1003 = vset.pattern.permute.xlu0 9
      %1004 = vperm.xlu0 %1003, %v927
      %v1005 = vpop.permute.xlu0 %1004
      %1007 = vset.pattern.permute.xlu0 9
      %1008 = vperm.xlu0 %1007, %v928
      %v1009 = vpop.permute.xlu0 %1008
      %1011 = vset.pattern.permute.xlu0 9
      %1012 = vperm.xlu0 %1011, %v929
      %v1013 = vpop.permute.xlu0 %1012
      %1015 = vset.pattern.permute.xlu0 9
      %1016 = vperm.xlu0 %1015, %v930
      %v1017 = vpop.permute.xlu0 %1016
      %v1019 = vmul.f32 %v1005, %v536
      %v1020 = vmul.f32 %v1009, %v539
      %v1021 = vmul.f32 %v1013, %v544
      %v1022 = vmul.f32 %v1017, %v547
      %v1023 = vmax.f32 %v999, %v1019
      %v1024 = vmax.f32 %v1000, %v1020
      %v1025 = vmax.f32 %v1001, %v1021
      %v1026 = vmax.f32 %v1002, %v1022
      %1027 = vset.pattern.permute.xlu0 10
      %1028 = vperm.xlu0 %1027, %v927
      %v1029 = vpop.permute.xlu0 %1028
      %1031 = vset.pattern.permute.xlu0 10
      %1032 = vperm.xlu0 %1031, %v928
      %v1033 = vpop.permute.xlu0 %1032
      %1035 = vset.pattern.permute.xlu0 10
      %1036 = vperm.xlu0 %1035, %v929
      %v1037 = vpop.permute.xlu0 %1036
      %1039 = vset.pattern.permute.xlu0 10
      %1040 = vperm.xlu0 %1039, %v930
      %v1041 = vpop.permute.xlu0 %1040
      %v1043 = vmul.f32 %v1029, %v597
      %v1044 = vmul.f32 %v1033, %v600
      %v1045 = vmul.f32 %v1037, %v605
      %v1046 = vmul.f32 %v1041, %v608
      %v1047 = vmax.f32 %v1023, %v1043
      %v1048 = vmax.f32 %v1024, %v1044
      %v1049 = vmax.f32 %v1025, %v1045
      %v1050 = vmax.f32 %v1026, %v1046
      %1051 = vset.pattern.permute.xlu0 11
      %1052 = vperm.xlu0 %1051, %v927
      %v1053 = vpop.permute.xlu0 %1052
      %1055 = vset.pattern.permute.xlu0 11
      %1056 = vperm.xlu0 %1055, %v928
      %v1057 = vpop.permute.xlu0 %1056
      %1059 = vset.pattern.permute.xlu0 11
      %1060 = vperm.xlu0 %1059, %v929
      %v1061 = vpop.permute.xlu0 %1060
      %1063 = vset.pattern.permute.xlu0 11
      %1064 = vperm.xlu0 %1063, %v930
      %v1065 = vpop.permute.xlu0 %1064
      %v1067 = vmul.f32 %v1053, %v658
      %v1068 = vmul.f32 %v1057, %v661
      %v1069 = vmul.f32 %v1061, %v666
      %v1070 = vmul.f32 %v1065, %v669
      %v1071 = vmax.f32 %v1047, %v1067
      %v1072 = vmax.f32 %v1048, %v1068
      %v1073 = vmax.f32 %v1049, %v1069
      %v1074 = vmax.f32 %v1050, %v1070
      %v1075 = vpack.c.bf16 %v1072, %v1071
      %v1076 = vpack.c.bf16 %v1074, %v1073
      %v1078 = vsel %vm315, %v1075, 0
      %v1081 = vsel %vm315, %v1076, 0
      %1083 = vmatprep.subr.bf16.mxu0 0
      %1084 = vmatpush1.bf16.msra.mxu0 %v840
      %1085 = vmatprep.subr.bf16.mxu0 0
      %1086 = vmatpush1.bf16.msra.mxu0 %v841
      %1087 = vmatprep.subr.bf16.mxu0 0
      %1088 = vmatpush1.bf16.msra.mxu0 0
      %1089 = vmatprep.subr.bf16.mxu0 0
      %1090 = vmatpush1.bf16.msra.mxu0 0
      %1091 = vmatprep.subr.bf16.mxu0 0
      %1092 = vmatpush1.bf16.msra.mxu0 0
      %1093 = vmatprep.subr.bf16.mxu0 0
      %1094 = vmatpush1.bf16.msra.mxu0 0
      %1095 = vmatprep.subr.bf16.mxu0 0
      %1096 = vmatpush1.bf16.msra.mxu0 0
      %1097 = vmatprep.subr.bf16.mxu0 0
      %1098 = vmatpush1.bf16.msra.mxu0 0
      %1099 = vmatprep.subr.bf16.mxu0 0
      %1100 = vmatpush1.bf16.msra.mxu0 0
      %1101 = vmatprep.subr.bf16.mxu0 0
      %1102 = vmatpush1.bf16.msra.mxu0 0
      %1103 = vmatprep.subr.bf16.mxu0 0
      %1104 = vmatpush1.bf16.msra.mxu0 0
      %1105 = vmatprep.subr.bf16.mxu0 0
      %1106 = vmatpush1.bf16.msra.mxu0 0
      %1107 = vmatprep.subr.bf16.mxu0 0
      %1108 = vmatpush1.bf16.msra.mxu0 0
      %1109 = vmatprep.subr.bf16.mxu0 0
      %1110 = vmatpush1.bf16.msra.mxu0 0
      %1111 = vmatprep.subr.bf16.mxu0 0
      %1112 = vmatpush1.bf16.msra.mxu0 0
      %1113 = vmatprep.subr.bf16.mxu0 0
      %1114 = vmatpush1.bf16.msra.mxu0 0
      %1115 = vmatprep.mubr.bf16.mxu0 0
      %1116 = vmatmul.mubr.bf16.gmra.mrb[0].mxu0 %v1078
      %v1117 = vpop.f32.mrb[0].mxu0
      %v1118 = vadd.f32 %v830, %v1117
      %v1119 = vpop.f32.mrb[0].mxu0
      %v1120 = vpop.f32.mrb[0].mxu0
      %v1121 = vadd.f32 %v830, %v1120
      %v1122 = vpop.f32.mrb[0].mxu0
      %1123 = vmatprep.mubr.bf16.mxu0 0
      %1124 = vmatmul.mubr.bf16.gmra.mrb[0].mxu0 %v1081
      %v1125 = vpop.f32.mrb[0].mxu0
      %v1126 = vadd.f32 %v830, %v1125
      %v1127 = vpop.f32.mrb[0].mxu0
      %v1128 = vpop.f32.mrb[0].mxu0
      %v1129 = vadd.f32 %v830, %v1128
      %v1130 = vpop.f32.mrb[0].mxu0
      %1131 = vdwg.mxu0
      %1132 = vset.pattern.permute.xlu0 19
      %1133 = vperm.xlu0 %1132, %v927
      %v1134 = vpop.permute.xlu0 %1133
      %1136 = vset.pattern.permute.xlu0 19
      %1137 = vperm.xlu0 %1136, %v928
      %v1138 = vpop.permute.xlu0 %1137
      %1140 = vset.pattern.permute.xlu0 19
      %1141 = vperm.xlu0 %1140, %v929
      %v1142 = vpop.permute.xlu0 %1141
      %1144 = vset.pattern.permute.xlu0 19
      %1145 = vperm.xlu0 %1144, %v930
      %v1146 = vpop.permute.xlu0 %1145
      %v1148 = vmul.f32 %v1118, %v1134
      %v1149 = vmul.f32 %v1121, %v1138
      %v1150 = vmul.f32 %v1126, %v1142
      %v1151 = vmul.f32 %v1129, %v1146
      %1156 = vrot.lane.b32.xlu0 %v1148, 32
      %v1157 = vpop.permute.xlu0 %1156
      %1158 = vrot.lane.b32.xlu0 %v1149, 32
      %v1159 = vpop.permute.xlu0 %1158
      %1160 = vrot.lane.b32.xlu0 %v1150, 32
      %v1161 = vpop.permute.xlu0 %1160
      %1162 = vrot.lane.b32.xlu0 %v1151, 32
      %v1163 = vpop.permute.xlu0 %1162
      %vm1168 = vcmask 523520
      %1169 = vst.msk [vmem:[%s278] sm:$0xff] %vm1168, %v1157
      %1170 = vst.msk [vmem:[%s278 + $0x8] sm:$0xff] %vm1168, %v1159
      %1171 = vst.msk [vmem:[%s278 + $0x10] sm:$0xff] %vm1168, %v1161
      %1172 = vst.msk [vmem:[%s278 + $0x18] sm:$0xff] %vm1168, %v1163
      %v1173 = vld [vmem:[%s272] sm:$0xf]
      %v1174 = vld [vmem:[%s272 + $0x4] sm:$0xf]
      %v1175 = vld [vmem:[%s272 + $0x8] sm:$0xf]
      %v1176 = vld [vmem:[%s272 + $0xc] sm:$0xf]
      %v1177 = vunpack.c.l.bf16 %v1173
      %v1178 = vunpack.c.l.bf16 %v1174
      %v1179 = vunpack.c.l.bf16 %v1175
      %v1180 = vunpack.c.l.bf16 %v1176
      %1182 = vset.pattern.permute.xlu0 12
      %1183 = vperm.xlu0 %1182, %v1177
      %v1184 = vpop.permute.xlu0 %1183
      %1187 = vset.pattern.permute.xlu0 12
      %1188 = vperm.xlu0 %1187, %v1178
      %v1189 = vpop.permute.xlu0 %1188
      %1192 = vset.pattern.permute.xlu0 12
      %1193 = vperm.xlu0 %1192, %v1179
      %v1194 = vpop.permute.xlu0 %1193
      %1197 = vset.pattern.permute.xlu0 12
      %1198 = vperm.xlu0 %1197, %v1180
      %v1199 = vpop.permute.xlu0 %1198
      %v1201 = vmul.f32 %v1184, %v357
      %v1202 = vmul.f32 %v1189, %v360
      %v1203 = vmul.f32 %v1194, %v365
      %v1204 = vmul.f32 %v1199, %v368
      %1205 = vset.pattern.permute.xlu0 13
      %1206 = vperm.xlu0 %1205, %v1177
      %v1207 = vpop.permute.xlu0 %1206
      %1209 = vset.pattern.permute.xlu0 13
      %1210 = vperm.xlu0 %1209, %v1178
      %v1211 = vpop.permute.xlu0 %1210
      %1213 = vset.pattern.permute.xlu0 13
      %1214 = vperm.xlu0 %1213, %v1179
      %v1215 = vpop.permute.xlu0 %1214
      %1217 = vset.pattern.permute.xlu0 13
      %1218 = vperm.xlu0 %1217, %v1180
      %v1219 = vpop.permute.xlu0 %1218
      %v1221 = vmul.f32 %v1207, %v418
      %v1222 = vmul.f32 %v1211, %v421
      %v1223 = vmul.f32 %v1215, %v426
      %v1224 = vmul.f32 %v1219, %v429
      %v1225 = vmax.f32 %v1201, %v1221
      %v1226 = vmax.f32 %v1202, %v1222
      %v1227 = vmax.f32 %v1203, %v1223
      %v1228 = vmax.f32 %v1204, %v1224
      %1229 = vset.pattern.permute.xlu0 14
      %1230 = vperm.xlu0 %1229, %v1177
      %v1231 = vpop.permute.xlu0 %1230
      %1233 = vset.pattern.permute.xlu0 14
      %1234 = vperm.xlu0 %1233, %v1178
      %v1235 = vpop.permute.xlu0 %1234
      %1237 = vset.pattern.permute.xlu0 14
      %1238 = vperm.xlu0 %1237, %v1179
      %v1239 = vpop.permute.xlu0 %1238
      %1241 = vset.pattern.permute.xlu0 14
      %1242 = vperm.xlu0 %1241, %v1180
      %v1243 = vpop.permute.xlu0 %1242
      %v1245 = vmul.f32 %v1231, %v477
      %v1246 = vmul.f32 %v1235, %v480
      %v1247 = vmul.f32 %v1239, %v485
      %v1248 = vmul.f32 %v1243, %v488
      %v1249 = vmax.f32 %v1225, %v1245
      %v1250 = vmax.f32 %v1226, %v1246
      %v1251 = vmax.f32 %v1227, %v1247
      %v1252 = vmax.f32 %v1228, %v1248
      %1253 = vset.pattern.permute.xlu0 15
      %1254 = vperm.xlu0 %1253, %v1177
      %v1255 = vpop.permute.xlu0 %1254
      %1257 = vset.pattern.permute.xlu0 15
      %1258 = vperm.xlu0 %1257, %v1178
      %v1259 = vpop.permute.xlu0 %1258
      %1261 = vset.pattern.permute.xlu0 15
      %1262 = vperm.xlu0 %1261, %v1179
      %v1263 = vpop.permute.xlu0 %1262
      %1265 = vset.pattern.permute.xlu0 15
      %1266 = vperm.xlu0 %1265, %v1180
      %v1267 = vpop.permute.xlu0 %1266
      %v1269 = vmul.f32 %v1255, %v536
      %v1270 = vmul.f32 %v1259, %v539
      %v1271 = vmul.f32 %v1263, %v544
      %v1272 = vmul.f32 %v1267, %v547
      %v1273 = vmax.f32 %v1249, %v1269
      %v1274 = vmax.f32 %v1250, %v1270
      %v1275 = vmax.f32 %v1251, %v1271
      %v1276 = vmax.f32 %v1252, %v1272
      %1277 = vset.pattern.permute.xlu0 16
      %1278 = vperm.xlu0 %1277, %v1177
      %v1279 = vpop.permute.xlu0 %1278
      %1281 = vset.pattern.permute.xlu0 16
      %1282 = vperm.xlu0 %1281, %v1178
      %v1283 = vpop.permute.xlu0 %1282
      %1285 = vset.pattern.permute.xlu0 16
      %1286 = vperm.xlu0 %1285, %v1179
      %v1287 = vpop.permute.xlu0 %1286
      %1289 = vset.pattern.permute.xlu0 16
      %1290 = vperm.xlu0 %1289, %v1180
      %v1291 = vpop.permute.xlu0 %1290
      %v1293 = vmul.f32 %v1279, %v597
      %v1294 = vmul.f32 %v1283, %v600
      %v1295 = vmul.f32 %v1287, %v605
      %v1296 = vmul.f32 %v1291, %v608
      %v1297 = vmax.f32 %v1273, %v1293
      %v1298 = vmax.f32 %v1274, %v1294
      %v1299 = vmax.f32 %v1275, %v1295
      %v1300 = vmax.f32 %v1276, %v1296
      %1301 = vset.pattern.permute.xlu0 17
      %1302 = vperm.xlu0 %1301, %v1177
      %v1303 = vpop.permute.xlu0 %1302
      %1305 = vset.pattern.permute.xlu0 17
      %1306 = vperm.xlu0 %1305, %v1178
      %v1307 = vpop.permute.xlu0 %1306
      %1309 = vset.pattern.permute.xlu0 17
      %1310 = vperm.xlu0 %1309, %v1179
      %v1311 = vpop.permute.xlu0 %1310
      %1313 = vset.pattern.permute.xlu0 17
      %1314 = vperm.xlu0 %1313, %v1180
      %v1315 = vpop.permute.xlu0 %1314
      %v1317 = vmul.f32 %v1303, %v658
      %v1318 = vmul.f32 %v1307, %v661
      %v1319 = vmul.f32 %v1311, %v666
      %v1320 = vmul.f32 %v1315, %v669
      %v1321 = vmax.f32 %v1297, %v1317
      %v1322 = vmax.f32 %v1298, %v1318
      %v1323 = vmax.f32 %v1299, %v1319
      %v1324 = vmax.f32 %v1300, %v1320
      %v1325 = vpack.c.bf16 %v1322, %v1321
      %v1326 = vpack.c.bf16 %v1324, %v1323
      %v1328 = vsel %vm315, %v1325, 0
      %v1331 = vsel %vm315, %v1326, 0
      %1333 = vmatprep.subr.bf16.mxu0 0
      %1334 = vmatpush1.bf16.msra.mxu0 %v840
      %1335 = vmatprep.subr.bf16.mxu0 0
      %1336 = vmatpush1.bf16.msra.mxu0 %v841
      %1337 = vmatprep.subr.bf16.mxu0 0
      %1338 = vmatpush1.bf16.msra.mxu0 0
      %1339 = vmatprep.subr.bf16.mxu0 0
      %1340 = vmatpush1.bf16.msra.mxu0 0
      %1341 = vmatprep.subr.bf16.mxu0 0
      %1342 = vmatpush1.bf16.msra.mxu0 0
      %1343 = vmatprep.subr.bf16.mxu0 0
      %1344 = vmatpush1.bf16.msra.mxu0 0
      %1345 = vmatprep.subr.bf16.mxu0 0
      %1346 = vmatpush1.bf16.msra.mxu0 0
      %1347 = vmatprep.subr.bf16.mxu0 0
      %1348 = vmatpush1.bf16.msra.mxu0 0
      %1349 = vmatprep.subr.bf16.mxu0 0
      %1350 = vmatpush1.bf16.msra.mxu0 0
      %1351 = vmatprep.subr.bf16.mxu0 0
      %1352 = vmatpush1.bf16.msra.mxu0 0
      %1353 = vmatprep.subr.bf16.mxu0 0
      %1354 = vmatpush1.bf16.msra.mxu0 0
      %1355 = vmatprep.subr.bf16.mxu0 0
      %1356 = vmatpush1.bf16.msra.mxu0 0
      %1357 = vmatprep.subr.bf16.mxu0 0
      %1358 = vmatpush1.bf16.msra.mxu0 0
      %1359 = vmatprep.subr.bf16.mxu0 0
      %1360 = vmatpush1.bf16.msra.mxu0 0
      %1361 = vmatprep.subr.bf16.mxu0 0
      %1362 = vmatpush1.bf16.msra.mxu0 0
      %1363 = vmatprep.subr.bf16.mxu0 0
      %1364 = vmatpush1.bf16.msra.mxu0 0
      %1365 = vmatprep.mubr.bf16.mxu0 0
      %1366 = vmatmul.mubr.bf16.gmra.mrb[0].mxu0 %v1328
      %v1367 = vpop.f32.mrb[0].mxu0
      %v1368 = vadd.f32 %v830, %v1367
      %v1369 = vpop.f32.mrb[0].mxu0
      %v1370 = vpop.f32.mrb[0].mxu0
      %v1371 = vadd.f32 %v830, %v1370
      %v1372 = vpop.f32.mrb[0].mxu0
      %1373 = vmatprep.mubr.bf16.mxu0 0
      %1374 = vmatmul.mubr.bf16.gmra.mrb[0].mxu0 %v1331
      %v1375 = vpop.f32.mrb[0].mxu0
      %v1376 = vadd.f32 %v830, %v1375
      %v1377 = vpop.f32.mrb[0].mxu0
      %v1378 = vpop.f32.mrb[0].mxu0
      %v1379 = vadd.f32 %v830, %v1378
      %v1380 = vpop.f32.mrb[0].mxu0
      %1381 = vdwg.mxu0
      %1382 = vset.pattern.permute.xlu0 20
      %1383 = vperm.xlu0 %1382, %v1177
      %v1384 = vpop.permute.xlu0 %1383
      %1386 = vset.pattern.permute.xlu0 20
      %1387 = vperm.xlu0 %1386, %v1178
      %v1388 = vpop.permute.xlu0 %1387
      %1390 = vset.pattern.permute.xlu0 20
      %1391 = vperm.xlu0 %1390, %v1179
      %v1392 = vpop.permute.xlu0 %1391
      %1394 = vset.pattern.permute.xlu0 20
      %1395 = vperm.xlu0 %1394, %v1180
      %v1396 = vpop.permute.xlu0 %1395
      %v1398 = vmul.f32 %v1368, %v1384
      %v1399 = vmul.f32 %v1371, %v1388
      %v1400 = vmul.f32 %v1376, %v1392
      %v1401 = vmul.f32 %v1379, %v1396
      %1406 = vrot.lane.b32.xlu0 %v1398, 64
      %v1407 = vpop.permute.xlu0 %1406
      %1408 = vrot.lane.b32.xlu0 %v1399, 64
      %v1409 = vpop.permute.xlu0 %1408
      %1410 = vrot.lane.b32.xlu0 %v1400, 64
      %v1411 = vpop.permute.xlu0 %1410
      %1412 = vrot.lane.b32.xlu0 %v1401, 64
      %v1413 = vpop.permute.xlu0 %1412
      %vm1418 = vcmask 785920
      %1419 = vst.msk [vmem:[%s278] sm:$0xff] %vm1418, %v1407
      %1420 = vst.msk [vmem:[%s278 + $0x8] sm:$0xff] %vm1418, %v1409
      %1421 = vst.msk [vmem:[%s278 + $0x10] sm:$0xff] %vm1418, %v1411
      %1422 = vst.msk [vmem:[%s278 + $0x18] sm:$0xff] %vm1418, %v1413
      %s1423 = smul.u32 4, %s17
      %p1424 = scmp.lt.s32.totalorder %s1423, 7
      %s1425 = scalar_select %p1424, %s1423, 7
      %s1426 = smul.addr %s1425, 8
      %s1427 = scalar_lea.vmem %s6, %s1426
      // Predicated region
      $region45: #{entity_pooling_forward.1} parent=43 // pred_check
        %p1428 = pneg %p171
      $region46: #{entity_pooling_forward.1} parent=43 // pred_check_branch
        %1430 = sbr.rel (%p1428) target = $region48
      $region47: #{entity_pooling_forward.1} parent=43 // pred_region
        %s1431 = smul.u32 4, %s17
      $region48: #{entity_pooling_forward.1} parent=43 // pred_fallthru
        _
    $region44: #{entity_pooling_forward.1} parent=5 // pred_fallthru
      _
    %p1432 = scmp.le.s32.totalorder 2, %s12
    // Predicated region
    $region49: #{entity_pooling_forward.1} parent=5 // pred_check
      %p1433 = pneg %p1432
    $region50: #{entity_pooling_forward.1} parent=5 // pred_check_branch
      %1435 = sbr.rel (%p1433) target = $region52
    $region51: #{entity_pooling_forward.1} parent=5 // pred_region
      %s1436 = ssub.s32 %s12, 2
      // Predicated region
      $region53: #{entity_pooling_forward.1} parent=51 // pred_check
        %p1437 = pneg %p177
      $region54: #{entity_pooling_forward.1} parent=51 // pred_check_branch
        %1439 = sbr.rel (%p1437) target = $region56
      $region55: #{entity_pooling_forward.1} parent=51 // pred_region
        %s1440 = smul.u32 4, %s18
        %p1441 = scmp.lt.s32.totalorder %s1440, 7
        %s1442 = scalar_select %p1441, %s1440, 7
        %s1443 = smul.addr %s1442, 8
        %s1444 = scalar_lea.vmem %s6, %s1443
      $region56: #{entity_pooling_forward.1} parent=51 // pred_fallthru
        _
    $region52: #{entity_pooling_forward.1} parent=5 // pred_fallthru
      _
  $region6: #{entity_pooling_forward.1} parent=0 // loop_footer
    %s16 = sadd.s32 1, %s12
  $region7: #{entity_pooling_forward.1} parent=0 // loop_footer_branch
    %11 = sbr.rel target = $region3
  $region8: #{entity_pooling_forward.1} parent=0 // loop_exit
    _

</llo_original>
